<compile_context>
chip_gen: v7x
topology: tpu7x:2x2x1
jax: 0.10.0
libtpu: 0.0.40
codegen_flags: <defaults>
</compile_context>

<pallas_src>
import functools

import numpy as np
import jax
import jax.numpy as jnp
from jax import lax
from jax.experimental import pallas as pl
from jax.experimental.pallas import tpu as pltpu


def _conv_block_kernel(emb_ref, patches_ref, wmat_ref, bias_ref,
                       wthr_ref, bthr_ref, walpha_ref, balpha_ref, out_ref,
                       *, t2v_dim, tb, hw, precision):
    """One grid step == TB consecutive batch elements.

    emb_ref     : SMEM (B*E,)        f32 -- Time2Vec embedding, flattened
    patches_ref : VMEM (CKK, TB*HW)  cd  -- im2col patches (batch-major cols)
    wmat_ref    : VMEM (Cout, CKK)   cd  -- conv weight with BN scale folded in
    bias_ref    : VMEM (Cout, 1)     f32 -- folded BN bias (+ conv bias)
    wthr_ref    : VMEM (E, Cout, HW) cd  -- threshold Linear weight (re-laid)
    bthr_ref    : VMEM (Cout, HW)    cd  -- threshold Linear bias
    walpha_ref  : VMEM (E, Cout, HW) cd  -- alpha Linear weight (re-laid)
    balpha_ref  : VMEM (Cout, HW)    cd  -- alpha Linear bias
    out_ref     : VMEM (Cout, TB*HW) f32 -- ConvBlock output columns
    (cd == compute dtype, bf16 by default; all accumulation is f32.)
    """
    i = pl.program_id(0)

    # Conv2d (+ folded eval-mode BN scale) for all TB elements in one MXU
    # matmul: (Cout, CKK) @ (CKK, TB*HW) -> (Cout, TB*HW), f32 accumulation.
    x = jnp.dot(wmat_ref[...], patches_ref[...],
                preferred_element_type=jnp.float32, precision=precision)
    x = x + bias_ref[...]                                  # BN bias + conv bias

    bthr = bthr_ref[...].astype(jnp.float32)               # (Cout, HW)
    balpha = balpha_ref[...].astype(jnp.float32)           # (Cout, HW)

    # TimeReLU: one (Cout, HW) column-slab per batch element of the TB block.
    # thresholds/alphas = Time2Vec(times) @ W^T + b, generated as E scalar*slab
    # VPU FMAs directly in the conv-output layout (no transposes), followed by
    # the leaky where() select.  Dropout(p=0) is the identity.
    for b in range(tb):                                     # static, small
        col = b * hw
        xs = x[:, col:col + hw]                             # (Cout, HW), lane-aligned
        th = bthr
        al = balpha
        for e in range(t2v_dim):                            # static E
            emb_e = emb_ref[(i * tb + b) * t2v_dim + e]     # SMEM f32 scalar
            th = th + emb_e * wthr_ref[e].astype(jnp.float32)
            al = al + emb_e * walpha_ref[e].astype(jnp.float32)
        out_ref[:, col:col + hw] = jnp.where(xs > th, xs, al * xs + th)


def _im2col_cols(x, ksize, stride, padding):
    """NCHW -> (Cin*K*K, B*Ho*Wo) patch matrix (pure layout, no arithmetic).

    Column b*Ho*Wo + ho*Wo + wo holds the receptive field of output pixel
    (ho, wo) of batch element b; rows are ordered (ci, ky, kx) to match
    conv_w.reshape(Cout, Cin*K*K).
    """
    B, Cin, H, W = x.shape
    Ho = (H + 2 * padding - ksize) // stride + 1
    Wo = (W + 2 * padding - ksize) // stride + 1
    xp = jnp.pad(x, ((0, 0), (0, 0), (padding, padding), (padding, padding)))
    cols = []
    for ky in range(ksize):
        for kx in range(ksize):
            cols.append(xp[:, :, ky:ky + stride * Ho:stride,
                               kx:kx + stride * Wo:stride])  # (B,Cin,Ho,Wo)
    pat = jnp.stack(cols, axis=2)                            # (B,Cin,KK,Ho,Wo)
    pat = pat.transpose(1, 2, 0, 3, 4)                       # (Cin,KK,B,Ho,Wo)
    return pat.reshape(Cin * ksize * ksize, B * Ho * Wo), Ho, Wo


def _pick_tb(batch, max_tb=16):
    """Largest divisor of `batch` <= max_tb that keeps >= 2 grid steps (so both
    v7x TensorCores get work); falls back to 1."""
    best = 1
    for d in range(2, min(max_tb, batch) + 1):
        if batch % d == 0 and batch // d >= 2:
            best = d
    return best


def _prepare_operands(X, times, params, *, ksize, stride, padding, eps,
                      compute_dtype):
    """Constant weight preprocessing + tiny time branch + patch layout."""
    X = X.astype(jnp.float32)
    Cout = params["conv_w"].shape[0]
    E = params["t2v_w"].shape[0]                 # time2vec_hidden_shape

    patches, Ho, Wo = _im2col_cols(X, ksize, stride, padding)  # (CKK, B*HW)
    CKK = patches.shape[0]
    HW = Ho * Wo
    B = X.shape[0]

    # Fold eval-mode BN into the conv: scale goes into the weight rows,
    # beta + (conv_b - mean) * scale becomes a single per-channel bias.
    scale = (params["bn_gamma"].astype(jnp.float32)
             / jnp.sqrt(params["bn_var"].astype(jnp.float32) + eps))   # (Cout,)
    w_mat = (params["conv_w"].reshape(Cout, CKK).astype(jnp.float32)
             * scale[:, None])
    bias = (params["bn_beta"].astype(jnp.float32)
            + (params["conv_b"].astype(jnp.float32)
               - params["bn_mean"].astype(jnp.float32)) * scale)

    # Time2Vec: (B,2) -> (B,E) linear + sin on dims 1.. (negligible glue).
    emb_raw = jnp.dot(times.astype(jnp.float32),
                      params["t2v_w"].T.astype(jnp.float32),
                      precision=lax.Precision.HIGHEST) + params["t2v_b"]
    emb = jnp.concatenate([emb_raw[:, :1], jnp.sin(emb_raw[:, 1:])], axis=1)

    # TimeReLU Linear weights re-laid to match the (Cout, HW) kernel slabs:
    # thr_w is (D, E) with D = Cout*HW (NCHW-flattened features).
    ops = dict(
        emb_flat=emb.reshape(-1).astype(jnp.float32),
        patches=patches.astype(compute_dtype),
        w_mat=w_mat.astype(compute_dtype),
        bias=bias.reshape(Cout, 1).astype(jnp.float32),
        wthr=params["thr_w"].T.reshape(E, Cout, HW).astype(compute_dtype),
        bthr=params["thr_b"].reshape(Cout, HW).astype(compute_dtype),
        walpha=params["alpha_w"].T.reshape(E, Cout, HW).astype(compute_dtype),
        balpha=params["alpha_b"].reshape(Cout, HW).astype(compute_dtype),
    )
    dims = dict(B=B, Cout=Cout, E=E, CKK=CKK, HW=HW, Ho=Ho, Wo=Wo)
    return ops, dims


def conv_block_forward(X, times, params, *, ksize, stride=1, padding=1,
                       eps=1e-5, compute_dtype=jnp.bfloat16, max_tb=16):
    """ConvBlock.forward: Conv2d -> BatchNorm2d(eval) -> TimeReLU -> Dropout(0)."""
    ops, d = _prepare_operands(X, times, params, ksize=ksize, stride=stride,
                               padding=padding, eps=eps,
                               compute_dtype=compute_dtype)
    B, Cout, E, CKK, HW = d["B"], d["Cout"], d["E"], d["CKK"], d["HW"]

    tb = _pick_tb(B, max_tb)
    precision = (lax.Precision.HIGHEST
                 if np.dtype(compute_dtype) == np.dtype(np.float32)
                 else lax.Precision.DEFAULT)

    out = pl.pallas_call(
        functools.partial(_conv_block_kernel, t2v_dim=E, tb=tb, hw=HW,
                          precision=precision),
        grid=(B // tb,),
        in_specs=[
            pl.BlockSpec(memory_space=pltpu.MemorySpace.SMEM),     # emb (B*E,)
            pl.BlockSpec((CKK, tb * HW), lambda i: (0, i)),        # patches
            pl.BlockSpec((Cout, CKK), lambda i: (0, 0)),           # conv*BN w
            pl.BlockSpec((Cout, 1), lambda i: (0, 0)),             # bias
            pl.BlockSpec((E, Cout, HW), lambda i: (0, 0, 0)),      # thr weight
            pl.BlockSpec((Cout, HW), lambda i: (0, 0)),            # thr bias
            pl.BlockSpec((E, Cout, HW), lambda i: (0, 0, 0)),      # alpha weight
            pl.BlockSpec((Cout, HW), lambda i: (0, 0)),            # alpha bias
        ],
        out_specs=pl.BlockSpec((Cout, tb * HW), lambda i: (0, i)),
        out_shape=jax.ShapeDtypeStruct((Cout, B * HW), jnp.float32),
        compiler_params=pltpu.CompilerParams(
            dimension_semantics=("parallel",)),
    )(ops["emb_flat"], ops["patches"], ops["w_mat"], ops["bias"],
      ops["wthr"], ops["bthr"], ops["walpha"], ops["balpha"])

    # Layout plumbing back to NCHW (tiny: Cout*B*HW floats).
    return (out.reshape(Cout, B, HW).transpose(1, 0, 2)
               .reshape(B, Cout, d["Ho"], d["Wo"]))


# ---------------------------- test helpers ---------------------------------

def _module_reference(X, times, params, *, ksize, stride, padding, eps=1e-5):
    """Pure-JAX f32 mirror of the PyTorch forward statements (eval-mode BN,
    leaky TimeReLU, Dropout(p=0)=identity).  Also returns the pre-ReLU
    activations and thresholds so the test can mask elements that sit exactly
    on the (discontinuous) where() boundary."""
    B = X.shape[0]
    conv = lax.conv_general_dilated(
        X, params["conv_w"], window_strides=(stride, stride),
        padding=[(padding, padding), (padding, padding)],
        dimension_numbers=("NCHW", "OIHW", "NCHW"),
        precision=lax.Precision.HIGHEST) + params["conv_b"][None, :, None, None]
    bn = (params["bn_gamma"][None, :, None, None]
          * (conv - params["bn_mean"][None, :, None, None])
          / jnp.sqrt(params["bn_var"][None, :, None, None] + eps)
          + params["bn_beta"][None, :, None, None])
    Xf = bn.reshape(B, -1)
    emb_raw = jnp.dot(times, params["t2v_w"].T,
                      precision=lax.Precision.HIGHEST) + params["t2v_b"]
    emb = jnp.concatenate([emb_raw[:, :1], jnp.sin(emb_raw[:, 1:])], axis=1)
    th = jnp.dot(emb, params["thr_w"].T,
                 precision=lax.Precision.HIGHEST) + params["thr_b"]
    al = jnp.dot(emb, params["alpha_w"].T,
                 precision=lax.Precision.HIGHEST) + params["alpha_b"]
    out = jnp.where(Xf > th, Xf, al * Xf + th)
    return out.reshape(conv.shape), Xf, th


def _operand_reference(ops, dims):
    """Plain-JAX forward computed from the kernel's preprocessed (possibly
    bf16) operands -- isolates kernel correctness from operand rounding."""
    B, Cout, E, HW = dims["B"], dims["Cout"], dims["E"], dims["HW"]
    conv = jnp.dot(ops["w_mat"].astype(jnp.float32),
                   ops["patches"].astype(jnp.float32),
                   precision=lax.Precision.HIGHEST) + ops["bias"]
    x = conv.reshape(Cout, B, HW).transpose(1, 0, 2)            # (B, Cout, HW)
    emb = ops["emb_flat"].reshape(B, E)
    th = (jnp.einsum("be,ech->bch", emb, ops["wthr"].astype(jnp.float32),
                     precision=lax.Precision.HIGHEST)
          + ops["bthr"].astype(jnp.float32))
    al = (jnp.einsum("be,ech->bch", emb, ops["walpha"].astype(jnp.float32),
                     precision=lax.Precision.HIGHEST)
          + ops["balpha"].astype(jnp.float32))
    out = jnp.where(x > th, x, al * x + th)
    return out, x, th


def _assert_close(actual, desired, x_lin, th, *, rtol, atol, boundary_tol):
    actual = np.asarray(actual).reshape(-1)
    desired = np.asarray(desired).reshape(-1)
    close = np.abs(actual - desired) <= atol + rtol * np.abs(desired)
    # TimeReLU's where() is discontinuous at X == threshold; fp rounding may
    # legitimately flip the branch for elements sitting on the boundary.
    boundary = (np.abs(np.asarray(x_lin).reshape(-1)
                       - np.asarray(th).reshape(-1)) <= boundary_tol)
    bad = ~(close | boundary)
    assert not bad.any(), (
        f"{int(bad.sum())} mismatched elements, max abs err "
        f"{np.abs(actual - desired)[bad].max()}")


if __name__ == "__main__":
    B, Cin, H, W = 8, 4, 16, 16
    Cout, K, S, P = 8, 3, 1, 1
    Tshape, E = 2, 8                                 # time_shape, time2vec dim
    Ho = (H + 2 * P - K) // S + 1
    Wo = (W + 2 * P - K) // S + 1
    D = Cout * Ho * Wo                               # time_relu_size

    keys = jax.random.split(jax.random.PRNGKey(0), 14)
    params = dict(
        conv_w=0.1 * jax.random.normal(keys[0], (Cout, Cin, K, K), jnp.float32),
        conv_b=0.1 * jax.random.normal(keys[1], (Cout,), jnp.float32),
        bn_gamma=1.0 + 0.1 * jax.random.normal(keys[2], (Cout,), jnp.float32),
        bn_beta=0.1 * jax.random.normal(keys[3], (Cout,), jnp.float32),
        bn_mean=0.1 * jax.random.normal(keys[4], (Cout,), jnp.float32),
        bn_var=jax.random.uniform(keys[5], (Cout,), jnp.float32, 0.5, 1.5),
        t2v_w=0.5 * jax.random.normal(keys[6], (E, Tshape), jnp.float32),
        t2v_b=0.5 * jax.random.normal(keys[7], (E,), jnp.float32),
        thr_w=0.1 * jax.random.normal(keys[8], (D, E), jnp.float32),
        thr_b=0.1 * jax.random.normal(keys[9], (D,), jnp.float32),
        alpha_w=0.1 * jax.random.normal(keys[10], (D, E), jnp.float32),
        alpha_b=0.1 * jax.random.normal(keys[11], (D,), jnp.float32),
    )
    X = jax.random.normal(keys[12], (B, Cin, H, W), jnp.float32)
    times = jax.random.uniform(keys[13], (B, Tshape), jnp.float32, 0.0, 1.0)

    # Performance-default path: bf16 operand storage, f32 accumulation.
    out_bf16 = jax.block_until_ready(
        conv_block_forward(X, times, params, ksize=K, stride=S, padding=P,
                           compute_dtype=jnp.bfloat16))
    # Exact-semantics path: f32 operands, HIGHEST matmul precision.
    out_f32 = jax.block_until_ready(
        conv_block_forward(X, times, params, ksize=K, stride=S, padding=P,
                           compute_dtype=jnp.float32))

    # 1) f32 kernel vs. a literal mirror of the PyTorch forward.
    ref, x_lin, th = _module_reference(X, times, params, ksize=K, stride=S,
                                       padding=P)
    _assert_close(out_f32, ref, x_lin, th, rtol=1e-4, atol=1e-4,
                  boundary_tol=1e-3)

    # 2) bf16 kernel vs. a plain-JAX forward built from the same bf16 operands
    #    (isolates MXU/VPU correctness from the bf16 storage rounding).
    ops, dims = _prepare_operands(X, times, params, ksize=K, stride=S,
                                  padding=P, eps=1e-5,
                                  compute_dtype=jnp.bfloat16)
    ref_b, x_b, th_b = _operand_reference(ops, dims)
    _assert_close(out_bf16.reshape(B, Cout, Ho * Wo), ref_b, x_b, th_b,
                  rtol=1e-3, atol=1e-3, boundary_tol=1e-3)

    print("KERNEL_OK")
</pallas_src>

<mosaic_0001>
module attributes {stable_mosaic.version = 11 : i64} {
  func.func @_conv_block_kernel(%arg0: i32, %arg1: memref<64xf32, #tpu.memory_space<smem>>, %arg2: memref<36x1024xbf16, #tpu.memory_space<vmem>>, %arg3: memref<8x36xbf16, #tpu.memory_space<vmem>>, %arg4: memref<8x1xf32, #tpu.memory_space<vmem>>, %arg5: memref<8x8x256xbf16, #tpu.memory_space<vmem>>, %arg6: memref<8x256xbf16, #tpu.memory_space<vmem>>, %arg7: memref<8x8x256xbf16, #tpu.memory_space<vmem>>, %arg8: memref<8x256xbf16, #tpu.memory_space<vmem>>, %arg9: memref<8x1024xf32, #tpu.memory_space<vmem>>) attributes {dimension_semantics = [#tpu.dimension_semantics<parallel>], iteration_bounds = array<i64: 2>, scalar_prefetch = 0 : i64, scratch_operands = 0 : i64, tpu.core_type = #tpu.core_type<tc>, window_params = [{transform_indices = @transform_0, window_bounds = array<i64: 64>}, {transform_indices = @transform_1, window_bounds = array<i64: 36, 1024>}, {pipeline_mode = #tpu.pipeline_mode<synchronous>, transform_indices = @transform_2, window_bounds = array<i64: 8, 36>}, {pipeline_mode = #tpu.pipeline_mode<synchronous>, transform_indices = @transform_3, window_bounds = array<i64: 8, 1>}, {pipeline_mode = #tpu.pipeline_mode<synchronous>, transform_indices = @transform_4, window_bounds = array<i64: 8, 8, 256>}, {pipeline_mode = #tpu.pipeline_mode<synchronous>, transform_indices = @transform_5, window_bounds = array<i64: 8, 256>}, {pipeline_mode = #tpu.pipeline_mode<synchronous>, transform_indices = @transform_6, window_bounds = array<i64: 8, 8, 256>}, {pipeline_mode = #tpu.pipeline_mode<synchronous>, transform_indices = @transform_7, window_bounds = array<i64: 8, 256>}, {transform_indices = @transform_8, window_bounds = array<i64: 8, 1024>}]} {
    %c0 = arith.constant 0 : index
    %c0_0 = arith.constant 0 : index
    %0 = vector.load %arg3[%c0, %c0_0] : memref<8x36xbf16, #tpu.memory_space<vmem>>, vector<8x36xbf16>
    %c0_1 = arith.constant 0 : index
    %c0_2 = arith.constant 0 : index
    %1 = vector.load %arg2[%c0_1, %c0_2] : memref<36x1024xbf16, #tpu.memory_space<vmem>>, vector<36x1024xbf16>
    %cst = arith.constant dense<0.000000e+00> : vector<8x1024xf32>
    %2 = tpu.matmul %0, %1, %cst {dimension_numbers = #tpu.dot_dimension_numbers<[1], [0], [0], [1], [0, 0, 1, 1], [], []>} : vector<8x36xbf16>, vector<36x1024xbf16>, vector<8x1024xf32> -> vector<8x1024xf32>
    %c0_3 = arith.constant 0 : index
    %c0_4 = arith.constant 0 : index
    %3 = vector.load %arg4[%c0_3, %c0_4] : memref<8x1xf32, #tpu.memory_space<vmem>>, vector<8x1xf32>
    %4 = vector.broadcast %3 : vector<8x1xf32> to vector<8x1024xf32>
    %5 = arith.addf %2, %4 : vector<8x1024xf32>
    %c0_5 = arith.constant 0 : index
    %c0_6 = arith.constant 0 : index
    %6 = vector.load %arg6[%c0_5, %c0_6] : memref<8x256xbf16, #tpu.memory_space<vmem>>, vector<8x256xbf16>
    %7 = arith.extf %6 : vector<8x256xbf16> to vector<8x256xf32>
    %c0_7 = arith.constant 0 : index
    %c0_8 = arith.constant 0 : index
    %8 = vector.load %arg8[%c0_7, %c0_8] : memref<8x256xbf16, #tpu.memory_space<vmem>>, vector<8x256xbf16>
    %9 = arith.extf %8 : vector<8x256xbf16> to vector<8x256xf32>
    %10 = vector.extract_strided_slice %5 {offsets = [0, 0], sizes = [8, 256], strides = [1, 1]} : vector<8x1024xf32> to vector<8x256xf32>
    %c4_i32 = arith.constant 4 : i32
    %11 = arith.muli %arg0, %c4_i32 : i32
    %c0_i32 = arith.constant 0 : i32
    %12 = arith.addi %11, %c0_i32 : i32
    %c8_i32 = arith.constant 8 : i32
    %13 = arith.muli %12, %c8_i32 : i32
    %c0_i32_9 = arith.constant 0 : i32
    %14 = arith.addi %13, %c0_i32_9 : i32
    %15 = arith.index_cast %14 : i32 to index
    %16 = memref.load %arg1[%15] : memref<64xf32, #tpu.memory_space<smem>>
    %c0_10 = arith.constant 0 : index
    %c0_11 = arith.constant 0 : index
    %c0_12 = arith.constant 0 : index
    %17 = vector.load %arg5[%c0_10, %c0_11, %c0_12] : memref<8x8x256xbf16, #tpu.memory_space<vmem>>, vector<1x8x256xbf16>
    %18 = vector.shape_cast %17 : vector<1x8x256xbf16> to vector<8x256xbf16>
    %19 = arith.extf %18 : vector<8x256xbf16> to vector<8x256xf32>
    %20 = vector.broadcast %16 : f32 to vector<8x256xf32>
    %21 = arith.mulf %20, %19 : vector<8x256xf32>
    %22 = arith.addf %7, %21 : vector<8x256xf32>
    %c0_13 = arith.constant 0 : index
    %c0_14 = arith.constant 0 : index
    %c0_15 = arith.constant 0 : index
    %23 = vector.load %arg7[%c0_13, %c0_14, %c0_15] : memref<8x8x256xbf16, #tpu.memory_space<vmem>>, vector<1x8x256xbf16>
    %24 = vector.shape_cast %23 : vector<1x8x256xbf16> to vector<8x256xbf16>
    %25 = arith.extf %24 : vector<8x256xbf16> to vector<8x256xf32>
    %26 = vector.broadcast %16 : f32 to vector<8x256xf32>
    %27 = arith.mulf %26, %25 : vector<8x256xf32>
    %28 = arith.addf %9, %27 : vector<8x256xf32>
    %c4_i32_16 = arith.constant 4 : i32
    %29 = arith.muli %arg0, %c4_i32_16 : i32
    %c0_i32_17 = arith.constant 0 : i32
    %30 = arith.addi %29, %c0_i32_17 : i32
    %c8_i32_18 = arith.constant 8 : i32
    %31 = arith.muli %30, %c8_i32_18 : i32
    %c1_i32 = arith.constant 1 : i32
    %32 = arith.addi %31, %c1_i32 : i32
    %33 = arith.index_cast %32 : i32 to index
    %34 = memref.load %arg1[%33] : memref<64xf32, #tpu.memory_space<smem>>
    %c1 = arith.constant 1 : index
    %c0_19 = arith.constant 0 : index
    %c0_20 = arith.constant 0 : index
    %35 = vector.load %arg5[%c1, %c0_19, %c0_20] : memref<8x8x256xbf16, #tpu.memory_space<vmem>>, vector<1x8x256xbf16>
    %36 = vector.shape_cast %35 : vector<1x8x256xbf16> to vector<8x256xbf16>
    %37 = arith.extf %36 : vector<8x256xbf16> to vector<8x256xf32>
    %38 = vector.broadcast %34 : f32 to vector<8x256xf32>
    %39 = arith.mulf %38, %37 : vector<8x256xf32>
    %40 = arith.addf %22, %39 : vector<8x256xf32>
    %c1_21 = arith.constant 1 : index
    %c0_22 = arith.constant 0 : index
    %c0_23 = arith.constant 0 : index
    %41 = vector.load %arg7[%c1_21, %c0_22, %c0_23] : memref<8x8x256xbf16, #tpu.memory_space<vmem>>, vector<1x8x256xbf16>
    %42 = vector.shape_cast %41 : vector<1x8x256xbf16> to vector<8x256xbf16>
    %43 = arith.extf %42 : vector<8x256xbf16> to vector<8x256xf32>
    %44 = vector.broadcast %34 : f32 to vector<8x256xf32>
    %45 = arith.mulf %44, %43 : vector<8x256xf32>
    %46 = arith.addf %28, %45 : vector<8x256xf32>
    %c4_i32_24 = arith.constant 4 : i32
    %47 = arith.muli %arg0, %c4_i32_24 : i32
    %c0_i32_25 = arith.constant 0 : i32
    %48 = arith.addi %47, %c0_i32_25 : i32
    %c8_i32_26 = arith.constant 8 : i32
    %49 = arith.muli %48, %c8_i32_26 : i32
    %c2_i32 = arith.constant 2 : i32
    %50 = arith.addi %49, %c2_i32 : i32
    %51 = arith.index_cast %50 : i32 to index
    %52 = memref.load %arg1[%51] : memref<64xf32, #tpu.memory_space<smem>>
    %c2 = arith.constant 2 : index
    %c0_27 = arith.constant 0 : index
    %c0_28 = arith.constant 0 : index
    %53 = vector.load %arg5[%c2, %c0_27, %c0_28] : memref<8x8x256xbf16, #tpu.memory_space<vmem>>, vector<1x8x256xbf16>
    %54 = vector.shape_cast %53 : vector<1x8x256xbf16> to vector<8x256xbf16>
    %55 = arith.extf %54 : vector<8x256xbf16> to vector<8x256xf32>
    %56 = vector.broadcast %52 : f32 to vector<8x256xf32>
    %57 = arith.mulf %56, %55 : vector<8x256xf32>
    %58 = arith.addf %40, %57 : vector<8x256xf32>
    %c2_29 = arith.constant 2 : index
    %c0_30 = arith.constant 0 : index
    %c0_31 = arith.constant 0 : index
    %59 = vector.load %arg7[%c2_29, %c0_30, %c0_31] : memref<8x8x256xbf16, #tpu.memory_space<vmem>>, vector<1x8x256xbf16>
    %60 = vector.shape_cast %59 : vector<1x8x256xbf16> to vector<8x256xbf16>
    %61 = arith.extf %60 : vector<8x256xbf16> to vector<8x256xf32>
    %62 = vector.broadcast %52 : f32 to vector<8x256xf32>
    %63 = arith.mulf %62, %61 : vector<8x256xf32>
    %64 = arith.addf %46, %63 : vector<8x256xf32>
    %c4_i32_32 = arith.constant 4 : i32
    %65 = arith.muli %arg0, %c4_i32_32 : i32
    %c0_i32_33 = arith.constant 0 : i32
    %66 = arith.addi %65, %c0_i32_33 : i32
    %c8_i32_34 = arith.constant 8 : i32
    %67 = arith.muli %66, %c8_i32_34 : i32
    %c3_i32 = arith.constant 3 : i32
    %68 = arith.addi %67, %c3_i32 : i32
    %69 = arith.index_cast %68 : i32 to index
    %70 = memref.load %arg1[%69] : memref<64xf32, #tpu.memory_space<smem>>
    %c3 = arith.constant 3 : index
    %c0_35 = arith.constant 0 : index
    %c0_36 = arith.constant 0 : index
    %71 = vector.load %arg5[%c3, %c0_35, %c0_36] : memref<8x8x256xbf16, #tpu.memory_space<vmem>>, vector<1x8x256xbf16>
    %72 = vector.shape_cast %71 : vector<1x8x256xbf16> to vector<8x256xbf16>
    %73 = arith.extf %72 : vector<8x256xbf16> to vector<8x256xf32>
    %74 = vector.broadcast %70 : f32 to vector<8x256xf32>
    %75 = arith.mulf %74, %73 : vector<8x256xf32>
    %76 = arith.addf %58, %75 : vector<8x256xf32>
    %c3_37 = arith.constant 3 : index
    %c0_38 = arith.constant 0 : index
    %c0_39 = arith.constant 0 : index
    %77 = vector.load %arg7[%c3_37, %c0_38, %c0_39] : memref<8x8x256xbf16, #tpu.memory_space<vmem>>, vector<1x8x256xbf16>
    %78 = vector.shape_cast %77 : vector<1x8x256xbf16> to vector<8x256xbf16>
    %79 = arith.extf %78 : vector<8x256xbf16> to vector<8x256xf32>
    %80 = vector.broadcast %70 : f32 to vector<8x256xf32>
    %81 = arith.mulf %80, %79 : vector<8x256xf32>
    %82 = arith.addf %64, %81 : vector<8x256xf32>
    %c4_i32_40 = arith.constant 4 : i32
    %83 = arith.muli %arg0, %c4_i32_40 : i32
    %c0_i32_41 = arith.constant 0 : i32
    %84 = arith.addi %83, %c0_i32_41 : i32
    %c8_i32_42 = arith.constant 8 : i32
    %85 = arith.muli %84, %c8_i32_42 : i32
    %c4_i32_43 = arith.constant 4 : i32
    %86 = arith.addi %85, %c4_i32_43 : i32
    %87 = arith.index_cast %86 : i32 to index
    %88 = memref.load %arg1[%87] : memref<64xf32, #tpu.memory_space<smem>>
    %c4 = arith.constant 4 : index
    %c0_44 = arith.constant 0 : index
    %c0_45 = arith.constant 0 : index
    %89 = vector.load %arg5[%c4, %c0_44, %c0_45] : memref<8x8x256xbf16, #tpu.memory_space<vmem>>, vector<1x8x256xbf16>
    %90 = vector.shape_cast %89 : vector<1x8x256xbf16> to vector<8x256xbf16>
    %91 = arith.extf %90 : vector<8x256xbf16> to vector<8x256xf32>
    %92 = vector.broadcast %88 : f32 to vector<8x256xf32>
    %93 = arith.mulf %92, %91 : vector<8x256xf32>
    %94 = arith.addf %76, %93 : vector<8x256xf32>
    %c4_46 = arith.constant 4 : index
    %c0_47 = arith.constant 0 : index
    %c0_48 = arith.constant 0 : index
    %95 = vector.load %arg7[%c4_46, %c0_47, %c0_48] : memref<8x8x256xbf16, #tpu.memory_space<vmem>>, vector<1x8x256xbf16>
    %96 = vector.shape_cast %95 : vector<1x8x256xbf16> to vector<8x256xbf16>
    %97 = arith.extf %96 : vector<8x256xbf16> to vector<8x256xf32>
    %98 = vector.broadcast %88 : f32 to vector<8x256xf32>
    %99 = arith.mulf %98, %97 : vector<8x256xf32>
    %100 = arith.addf %82, %99 : vector<8x256xf32>
    %c4_i32_49 = arith.constant 4 : i32
    %101 = arith.muli %arg0, %c4_i32_49 : i32
    %c0_i32_50 = arith.constant 0 : i32
    %102 = arith.addi %101, %c0_i32_50 : i32
    %c8_i32_51 = arith.constant 8 : i32
    %103 = arith.muli %102, %c8_i32_51 : i32
    %c5_i32 = arith.constant 5 : i32
    %104 = arith.addi %103, %c5_i32 : i32
    %105 = arith.index_cast %104 : i32 to index
    %106 = memref.load %arg1[%105] : memref<64xf32, #tpu.memory_space<smem>>
    %c5 = arith.constant 5 : index
    %c0_52 = arith.constant 0 : index
    %c0_53 = arith.constant 0 : index
    %107 = vector.load %arg5[%c5, %c0_52, %c0_53] : memref<8x8x256xbf16, #tpu.memory_space<vmem>>, vector<1x8x256xbf16>
    %108 = vector.shape_cast %107 : vector<1x8x256xbf16> to vector<8x256xbf16>
    %109 = arith.extf %108 : vector<8x256xbf16> to vector<8x256xf32>
    %110 = vector.broadcast %106 : f32 to vector<8x256xf32>
    %111 = arith.mulf %110, %109 : vector<8x256xf32>
    %112 = arith.addf %94, %111 : vector<8x256xf32>
    %c5_54 = arith.constant 5 : index
    %c0_55 = arith.constant 0 : index
    %c0_56 = arith.constant 0 : index
    %113 = vector.load %arg7[%c5_54, %c0_55, %c0_56] : memref<8x8x256xbf16, #tpu.memory_space<vmem>>, vector<1x8x256xbf16>
    %114 = vector.shape_cast %113 : vector<1x8x256xbf16> to vector<8x256xbf16>
    %115 = arith.extf %114 : vector<8x256xbf16> to vector<8x256xf32>
    %116 = vector.broadcast %106 : f32 to vector<8x256xf32>
    %117 = arith.mulf %116, %115 : vector<8x256xf32>
    %118 = arith.addf %100, %117 : vector<8x256xf32>
    %c4_i32_57 = arith.constant 4 : i32
    %119 = arith.muli %arg0, %c4_i32_57 : i32
    %c0_i32_58 = arith.constant 0 : i32
    %120 = arith.addi %119, %c0_i32_58 : i32
    %c8_i32_59 = arith.constant 8 : i32
    %121 = arith.muli %120, %c8_i32_59 : i32
    %c6_i32 = arith.constant 6 : i32
    %122 = arith.addi %121, %c6_i32 : i32
    %123 = arith.index_cast %122 : i32 to index
    %124 = memref.load %arg1[%123] : memref<64xf32, #tpu.memory_space<smem>>
    %c6 = arith.constant 6 : index
    %c0_60 = arith.constant 0 : index
    %c0_61 = arith.constant 0 : index
    %125 = vector.load %arg5[%c6, %c0_60, %c0_61] : memref<8x8x256xbf16, #tpu.memory_space<vmem>>, vector<1x8x256xbf16>
    %126 = vector.shape_cast %125 : vector<1x8x256xbf16> to vector<8x256xbf16>
    %127 = arith.extf %126 : vector<8x256xbf16> to vector<8x256xf32>
    %128 = vector.broadcast %124 : f32 to vector<8x256xf32>
    %129 = arith.mulf %128, %127 : vector<8x256xf32>
    %130 = arith.addf %112, %129 : vector<8x256xf32>
    %c6_62 = arith.constant 6 : index
    %c0_63 = arith.constant 0 : index
    %c0_64 = arith.constant 0 : index
    %131 = vector.load %arg7[%c6_62, %c0_63, %c0_64] : memref<8x8x256xbf16, #tpu.memory_space<vmem>>, vector<1x8x256xbf16>
    %132 = vector.shape_cast %131 : vector<1x8x256xbf16> to vector<8x256xbf16>
    %133 = arith.extf %132 : vector<8x256xbf16> to vector<8x256xf32>
    %134 = vector.broadcast %124 : f32 to vector<8x256xf32>
    %135 = arith.mulf %134, %133 : vector<8x256xf32>
    %136 = arith.addf %118, %135 : vector<8x256xf32>
    %c4_i32_65 = arith.constant 4 : i32
    %137 = arith.muli %arg0, %c4_i32_65 : i32
    %c0_i32_66 = arith.constant 0 : i32
    %138 = arith.addi %137, %c0_i32_66 : i32
    %c8_i32_67 = arith.constant 8 : i32
    %139 = arith.muli %138, %c8_i32_67 : i32
    %c7_i32 = arith.constant 7 : i32
    %140 = arith.addi %139, %c7_i32 : i32
    %141 = arith.index_cast %140 : i32 to index
    %142 = memref.load %arg1[%141] : memref<64xf32, #tpu.memory_space<smem>>
    %c7 = arith.constant 7 : index
    %c0_68 = arith.constant 0 : index
    %c0_69 = arith.constant 0 : index
    %143 = vector.load %arg5[%c7, %c0_68, %c0_69] : memref<8x8x256xbf16, #tpu.memory_space<vmem>>, vector<1x8x256xbf16>
    %144 = vector.shape_cast %143 : vector<1x8x256xbf16> to vector<8x256xbf16>
    %145 = arith.extf %144 : vector<8x256xbf16> to vector<8x256xf32>
    %146 = vector.broadcast %142 : f32 to vector<8x256xf32>
    %147 = arith.mulf %146, %145 : vector<8x256xf32>
    %148 = arith.addf %130, %147 : vector<8x256xf32>
    %c7_70 = arith.constant 7 : index
    %c0_71 = arith.constant 0 : index
    %c0_72 = arith.constant 0 : index
    %149 = vector.load %arg7[%c7_70, %c0_71, %c0_72] : memref<8x8x256xbf16, #tpu.memory_space<vmem>>, vector<1x8x256xbf16>
    %150 = vector.shape_cast %149 : vector<1x8x256xbf16> to vector<8x256xbf16>
    %151 = arith.extf %150 : vector<8x256xbf16> to vector<8x256xf32>
    %152 = vector.broadcast %142 : f32 to vector<8x256xf32>
    %153 = arith.mulf %152, %151 : vector<8x256xf32>
    %154 = arith.addf %136, %153 : vector<8x256xf32>
    %155 = arith.cmpf ogt, %10, %148 : vector<8x256xf32>
    %156 = arith.mulf %154, %10 : vector<8x256xf32>
    %157 = arith.addf %156, %148 : vector<8x256xf32>
    %158 = arith.select %155, %10, %157 : vector<8x256xi1>, vector<8x256xf32>
    %c0_73 = arith.constant 0 : index
    %c0_74 = arith.constant 0 : index
    %159 = vector.load %arg9[%c0_73, %c0_74] : memref<8x1024xf32, #tpu.memory_space<vmem>>, vector<8x256xf32>
    tpu.vector_store %arg9[%c0_73, %c0_74], %158 {strides = array<i32>} : memref<8x1024xf32, #tpu.memory_space<vmem>>, vector<8x256xf32>,
    %160 = vector.extract_strided_slice %5 {offsets = [0, 256], sizes = [8, 256], strides = [1, 1]} : vector<8x1024xf32> to vector<8x256xf32>
    %c4_i32_75 = arith.constant 4 : i32
    %161 = arith.muli %arg0, %c4_i32_75 : i32
    %c1_i32_76 = arith.constant 1 : i32
    %162 = arith.addi %161, %c1_i32_76 : i32
    %c8_i32_77 = arith.constant 8 : i32
    %163 = arith.muli %162, %c8_i32_77 : i32
    %c0_i32_78 = arith.constant 0 : i32
    %164 = arith.addi %163, %c0_i32_78 : i32
    %165 = arith.index_cast %164 : i32 to index
    %166 = memref.load %arg1[%165] : memref<64xf32, #tpu.memory_space<smem>>
    %c0_79 = arith.constant 0 : index
    %c0_80 = arith.constant 0 : index
    %c0_81 = arith.constant 0 : index
    %167 = vector.load %arg5[%c0_79, %c0_80, %c0_81] : memref<8x8x256xbf16, #tpu.memory_space<vmem>>, vector<1x8x256xbf16>
    %168 = vector.shape_cast %167 : vector<1x8x256xbf16> to vector<8x256xbf16>
    %169 = arith.extf %168 : vector<8x256xbf16> to vector<8x256xf32>
    %170 = vector.broadcast %166 : f32 to vector<8x256xf32>
    %171 = arith.mulf %170, %169 : vector<8x256xf32>
    %172 = arith.addf %7, %171 : vector<8x256xf32>
    %c0_82 = arith.constant 0 : index
    %c0_83 = arith.constant 0 : index
    %c0_84 = arith.constant 0 : index
    %173 = vector.load %arg7[%c0_82, %c0_83, %c0_84] : memref<8x8x256xbf16, #tpu.memory_space<vmem>>, vector<1x8x256xbf16>
    %174 = vector.shape_cast %173 : vector<1x8x256xbf16> to vector<8x256xbf16>
    %175 = arith.extf %174 : vector<8x256xbf16> to vector<8x256xf32>
    %176 = vector.broadcast %166 : f32 to vector<8x256xf32>
    %177 = arith.mulf %176, %175 : vector<8x256xf32>
    %178 = arith.addf %9, %177 : vector<8x256xf32>
    %c4_i32_85 = arith.constant 4 : i32
    %179 = arith.muli %arg0, %c4_i32_85 : i32
    %c1_i32_86 = arith.constant 1 : i32
    %180 = arith.addi %179, %c1_i32_86 : i32
    %c8_i32_87 = arith.constant 8 : i32
    %181 = arith.muli %180, %c8_i32_87 : i32
    %c1_i32_88 = arith.constant 1 : i32
    %182 = arith.addi %181, %c1_i32_88 : i32
    %183 = arith.index_cast %182 : i32 to index
    %184 = memref.load %arg1[%183] : memref<64xf32, #tpu.memory_space<smem>>
    %c1_89 = arith.constant 1 : index
    %c0_90 = arith.constant 0 : index
    %c0_91 = arith.constant 0 : index
    %185 = vector.load %arg5[%c1_89, %c0_90, %c0_91] : memref<8x8x256xbf16, #tpu.memory_space<vmem>>, vector<1x8x256xbf16>
    %186 = vector.shape_cast %185 : vector<1x8x256xbf16> to vector<8x256xbf16>
    %187 = arith.extf %186 : vector<8x256xbf16> to vector<8x256xf32>
    %188 = vector.broadcast %184 : f32 to vector<8x256xf32>
    %189 = arith.mulf %188, %187 : vector<8x256xf32>
    %190 = arith.addf %172, %189 : vector<8x256xf32>
    %c1_92 = arith.constant 1 : index
    %c0_93 = arith.constant 0 : index
    %c0_94 = arith.constant 0 : index
    %191 = vector.load %arg7[%c1_92, %c0_93, %c0_94] : memref<8x8x256xbf16, #tpu.memory_space<vmem>>, vector<1x8x256xbf16>
    %192 = vector.shape_cast %191 : vector<1x8x256xbf16> to vector<8x256xbf16>
    %193 = arith.extf %192 : vector<8x256xbf16> to vector<8x256xf32>
    %194 = vector.broadcast %184 : f32 to vector<8x256xf32>
    %195 = arith.mulf %194, %193 : vector<8x256xf32>
    %196 = arith.addf %178, %195 : vector<8x256xf32>
    %c4_i32_95 = arith.constant 4 : i32
    %197 = arith.muli %arg0, %c4_i32_95 : i32
    %c1_i32_96 = arith.constant 1 : i32
    %198 = arith.addi %197, %c1_i32_96 : i32
    %c8_i32_97 = arith.constant 8 : i32
    %199 = arith.muli %198, %c8_i32_97 : i32
    %c2_i32_98 = arith.constant 2 : i32
    %200 = arith.addi %199, %c2_i32_98 : i32
    %201 = arith.index_cast %200 : i32 to index
    %202 = memref.load %arg1[%201] : memref<64xf32, #tpu.memory_space<smem>>
    %c2_99 = arith.constant 2 : index
    %c0_100 = arith.constant 0 : index
    %c0_101 = arith.constant 0 : index
    %203 = vector.load %arg5[%c2_99, %c0_100, %c0_101] : memref<8x8x256xbf16, #tpu.memory_space<vmem>>, vector<1x8x256xbf16>
    %204 = vector.shape_cast %203 : vector<1x8x256xbf16> to vector<8x256xbf16>
    %205 = arith.extf %204 : vector<8x256xbf16> to vector<8x256xf32>
    %206 = vector.broadcast %202 : f32 to vector<8x256xf32>
    %207 = arith.mulf %206, %205 : vector<8x256xf32>
    %208 = arith.addf %190, %207 : vector<8x256xf32>
    %c2_102 = arith.constant 2 : index
    %c0_103 = arith.constant 0 : index
    %c0_104 = arith.constant 0 : index
    %209 = vector.load %arg7[%c2_102, %c0_103, %c0_104] : memref<8x8x256xbf16, #tpu.memory_space<vmem>>, vector<1x8x256xbf16>
    %210 = vector.shape_cast %209 : vector<1x8x256xbf16> to vector<8x256xbf16>
    %211 = arith.extf %210 : vector<8x256xbf16> to vector<8x256xf32>
    %212 = vector.broadcast %202 : f32 to vector<8x256xf32>
    %213 = arith.mulf %212, %211 : vector<8x256xf32>
    %214 = arith.addf %196, %213 : vector<8x256xf32>
    %c4_i32_105 = arith.constant 4 : i32
    %215 = arith.muli %arg0, %c4_i32_105 : i32
    %c1_i32_106 = arith.constant 1 : i32
    %216 = arith.addi %215, %c1_i32_106 : i32
    %c8_i32_107 = arith.constant 8 : i32
    %217 = arith.muli %216, %c8_i32_107 : i32
    %c3_i32_108 = arith.constant 3 : i32
    %218 = arith.addi %217, %c3_i32_108 : i32
    %219 = arith.index_cast %218 : i32 to index
    %220 = memref.load %arg1[%219] : memref<64xf32, #tpu.memory_space<smem>>
    %c3_109 = arith.constant 3 : index
    %c0_110 = arith.constant 0 : index
    %c0_111 = arith.constant 0 : index
    %221 = vector.load %arg5[%c3_109, %c0_110, %c0_111] : memref<8x8x256xbf16, #tpu.memory_space<vmem>>, vector<1x8x256xbf16>
    %222 = vector.shape_cast %221 : vector<1x8x256xbf16> to vector<8x256xbf16>
    %223 = arith.extf %222 : vector<8x256xbf16> to vector<8x256xf32>
    %224 = vector.broadcast %220 : f32 to vector<8x256xf32>
    %225 = arith.mulf %224, %223 : vector<8x256xf32>
    %226 = arith.addf %208, %225 : vector<8x256xf32>
    %c3_112 = arith.constant 3 : index
    %c0_113 = arith.constant 0 : index
    %c0_114 = arith.constant 0 : index
    %227 = vector.load %arg7[%c3_112, %c0_113, %c0_114] : memref<8x8x256xbf16, #tpu.memory_space<vmem>>, vector<1x8x256xbf16>
    %228 = vector.shape_cast %227 : vector<1x8x256xbf16> to vector<8x256xbf16>
    %229 = arith.extf %228 : vector<8x256xbf16> to vector<8x256xf32>
    %230 = vector.broadcast %220 : f32 to vector<8x256xf32>
    %231 = arith.mulf %230, %229 : vector<8x256xf32>
    %232 = arith.addf %214, %231 : vector<8x256xf32>
    %c4_i32_115 = arith.constant 4 : i32
    %233 = arith.muli %arg0, %c4_i32_115 : i32
    %c1_i32_116 = arith.constant 1 : i32
    %234 = arith.addi %233, %c1_i32_116 : i32
    %c8_i32_117 = arith.constant 8 : i32
    %235 = arith.muli %234, %c8_i32_117 : i32
    %c4_i32_118 = arith.constant 4 : i32
    %236 = arith.addi %235, %c4_i32_118 : i32
    %237 = arith.index_cast %236 : i32 to index
    %238 = memref.load %arg1[%237] : memref<64xf32, #tpu.memory_space<smem>>
    %c4_119 = arith.constant 4 : index
    %c0_120 = arith.constant 0 : index
    %c0_121 = arith.constant 0 : index
    %239 = vector.load %arg5[%c4_119, %c0_120, %c0_121] : memref<8x8x256xbf16, #tpu.memory_space<vmem>>, vector<1x8x256xbf16>
    %240 = vector.shape_cast %239 : vector<1x8x256xbf16> to vector<8x256xbf16>
    %241 = arith.extf %240 : vector<8x256xbf16> to vector<8x256xf32>
    %242 = vector.broadcast %238 : f32 to vector<8x256xf32>
    %243 = arith.mulf %242, %241 : vector<8x256xf32>
    %244 = arith.addf %226, %243 : vector<8x256xf32>
    %c4_122 = arith.constant 4 : index
    %c0_123 = arith.constant 0 : index
    %c0_124 = arith.constant 0 : index
    %245 = vector.load %arg7[%c4_122, %c0_123, %c0_124] : memref<8x8x256xbf16, #tpu.memory_space<vmem>>, vector<1x8x256xbf16>
    %246 = vector.shape_cast %245 : vector<1x8x256xbf16> to vector<8x256xbf16>
    %247 = arith.extf %246 : vector<8x256xbf16> to vector<8x256xf32>
    %248 = vector.broadcast %238 : f32 to vector<8x256xf32>
    %249 = arith.mulf %248, %247 : vector<8x256xf32>
    %250 = arith.addf %232, %249 : vector<8x256xf32>
    %c4_i32_125 = arith.constant 4 : i32
    %251 = arith.muli %arg0, %c4_i32_125 : i32
    %c1_i32_126 = arith.constant 1 : i32
    %252 = arith.addi %251, %c1_i32_126 : i32
    %c8_i32_127 = arith.constant 8 : i32
    %253 = arith.muli %252, %c8_i32_127 : i32
    %c5_i32_128 = arith.constant 5 : i32
    %254 = arith.addi %253, %c5_i32_128 : i32
    %255 = arith.index_cast %254 : i32 to index
    %256 = memref.load %arg1[%255] : memref<64xf32, #tpu.memory_space<smem>>
    %c5_129 = arith.constant 5 : index
    %c0_130 = arith.constant 0 : index
    %c0_131 = arith.constant 0 : index
    %257 = vector.load %arg5[%c5_129, %c0_130, %c0_131] : memref<8x8x256xbf16, #tpu.memory_space<vmem>>, vector<1x8x256xbf16>
    %258 = vector.shape_cast %257 : vector<1x8x256xbf16> to vector<8x256xbf16>
    %259 = arith.extf %258 : vector<8x256xbf16> to vector<8x256xf32>
    %260 = vector.broadcast %256 : f32 to vector<8x256xf32>
    %261 = arith.mulf %260, %259 : vector<8x256xf32>
    %262 = arith.addf %244, %261 : vector<8x256xf32>
    %c5_132 = arith.constant 5 : index
    %c0_133 = arith.constant 0 : index
    %c0_134 = arith.constant 0 : index
    %263 = vector.load %arg7[%c5_132, %c0_133, %c0_134] : memref<8x8x256xbf16, #tpu.memory_space<vmem>>, vector<1x8x256xbf16>
    %264 = vector.shape_cast %263 : vector<1x8x256xbf16> to vector<8x256xbf16>
    %265 = arith.extf %264 : vector<8x256xbf16> to vector<8x256xf32>
    %266 = vector.broadcast %256 : f32 to vector<8x256xf32>
    %267 = arith.mulf %266, %265 : vector<8x256xf32>
    %268 = arith.addf %250, %267 : vector<8x256xf32>
    %c4_i32_135 = arith.constant 4 : i32
    %269 = arith.muli %arg0, %c4_i32_135 : i32
    %c1_i32_136 = arith.constant 1 : i32
    %270 = arith.addi %269, %c1_i32_136 : i32
    %c8_i32_137 = arith.constant 8 : i32
    %271 = arith.muli %270, %c8_i32_137 : i32
    %c6_i32_138 = arith.constant 6 : i32
    %272 = arith.addi %271, %c6_i32_138 : i32
    %273 = arith.index_cast %272 : i32 to index
    %274 = memref.load %arg1[%273] : memref<64xf32, #tpu.memory_space<smem>>
    %c6_139 = arith.constant 6 : index
    %c0_140 = arith.constant 0 : index
    %c0_141 = arith.constant 0 : index
    %275 = vector.load %arg5[%c6_139, %c0_140, %c0_141] : memref<8x8x256xbf16, #tpu.memory_space<vmem>>, vector<1x8x256xbf16>
    %276 = vector.shape_cast %275 : vector<1x8x256xbf16> to vector<8x256xbf16>
    %277 = arith.extf %276 : vector<8x256xbf16> to vector<8x256xf32>
    %278 = vector.broadcast %274 : f32 to vector<8x256xf32>
    %279 = arith.mulf %278, %277 : vector<8x256xf32>
    %280 = arith.addf %262, %279 : vector<8x256xf32>
    %c6_142 = arith.constant 6 : index
    %c0_143 = arith.constant 0 : index
    %c0_144 = arith.constant 0 : index
    %281 = vector.load %arg7[%c6_142, %c0_143, %c0_144] : memref<8x8x256xbf16, #tpu.memory_space<vmem>>, vector<1x8x256xbf16>
    %282 = vector.shape_cast %281 : vector<1x8x256xbf16> to vector<8x256xbf16>
    %283 = arith.extf %282 : vector<8x256xbf16> to vector<8x256xf32>
    %284 = vector.broadcast %274 : f32 to vector<8x256xf32>
    %285 = arith.mulf %284, %283 : vector<8x256xf32>
    %286 = arith.addf %268, %285 : vector<8x256xf32>
    %c4_i32_145 = arith.constant 4 : i32
    %287 = arith.muli %arg0, %c4_i32_145 : i32
    %c1_i32_146 = arith.constant 1 : i32
    %288 = arith.addi %287, %c1_i32_146 : i32
    %c8_i32_147 = arith.constant 8 : i32
    %289 = arith.muli %288, %c8_i32_147 : i32
    %c7_i32_148 = arith.constant 7 : i32
    %290 = arith.addi %289, %c7_i32_148 : i32
    %291 = arith.index_cast %290 : i32 to index
    %292 = memref.load %arg1[%291] : memref<64xf32, #tpu.memory_space<smem>>
    %c7_149 = arith.constant 7 : index
    %c0_150 = arith.constant 0 : index
    %c0_151 = arith.constant 0 : index
    %293 = vector.load %arg5[%c7_149, %c0_150, %c0_151] : memref<8x8x256xbf16, #tpu.memory_space<vmem>>, vector<1x8x256xbf16>
    %294 = vector.shape_cast %293 : vector<1x8x256xbf16> to vector<8x256xbf16>
    %295 = arith.extf %294 : vector<8x256xbf16> to vector<8x256xf32>
    %296 = vector.broadcast %292 : f32 to vector<8x256xf32>
    %297 = arith.mulf %296, %295 : vector<8x256xf32>
    %298 = arith.addf %280, %297 : vector<8x256xf32>
    %c7_152 = arith.constant 7 : index
    %c0_153 = arith.constant 0 : index
    %c0_154 = arith.constant 0 : index
    %299 = vector.load %arg7[%c7_152, %c0_153, %c0_154] : memref<8x8x256xbf16, #tpu.memory_space<vmem>>, vector<1x8x256xbf16>
    %300 = vector.shape_cast %299 : vector<1x8x256xbf16> to vector<8x256xbf16>
    %301 = arith.extf %300 : vector<8x256xbf16> to vector<8x256xf32>
    %302 = vector.broadcast %292 : f32 to vector<8x256xf32>
    %303 = arith.mulf %302, %301 : vector<8x256xf32>
    %304 = arith.addf %286, %303 : vector<8x256xf32>
    %305 = arith.cmpf ogt, %160, %298 : vector<8x256xf32>
    %306 = arith.mulf %304, %160 : vector<8x256xf32>
    %307 = arith.addf %306, %298 : vector<8x256xf32>
    %308 = arith.select %305, %160, %307 : vector<8x256xi1>, vector<8x256xf32>
    %c0_155 = arith.constant 0 : index
    %c256 = arith.constant 256 : index
    %309 = vector.load %arg9[%c0_155, %c256] : memref<8x1024xf32, #tpu.memory_space<vmem>>, vector<8x256xf32>
    tpu.vector_store %arg9[%c0_155, %c256], %308 {strides = array<i32>} : memref<8x1024xf32, #tpu.memory_space<vmem>>, vector<8x256xf32>,
    %310 = vector.extract_strided_slice %5 {offsets = [0, 512], sizes = [8, 256], strides = [1, 1]} : vector<8x1024xf32> to vector<8x256xf32>
    %c4_i32_156 = arith.constant 4 : i32
    %311 = arith.muli %arg0, %c4_i32_156 : i32
    %c2_i32_157 = arith.constant 2 : i32
    %312 = arith.addi %311, %c2_i32_157 : i32
    %c8_i32_158 = arith.constant 8 : i32
    %313 = arith.muli %312, %c8_i32_158 : i32
    %c0_i32_159 = arith.constant 0 : i32
    %314 = arith.addi %313, %c0_i32_159 : i32
    %315 = arith.index_cast %314 : i32 to index
    %316 = memref.load %arg1[%315] : memref<64xf32, #tpu.memory_space<smem>>
    %c0_160 = arith.constant 0 : index
    %c0_161 = arith.constant 0 : index
    %c0_162 = arith.constant 0 : index
    %317 = vector.load %arg5[%c0_160, %c0_161, %c0_162] : memref<8x8x256xbf16, #tpu.memory_space<vmem>>, vector<1x8x256xbf16>
    %318 = vector.shape_cast %317 : vector<1x8x256xbf16> to vector<8x256xbf16>
    %319 = arith.extf %318 : vector<8x256xbf16> to vector<8x256xf32>
    %320 = vector.broadcast %316 : f32 to vector<8x256xf32>
    %321 = arith.mulf %320, %319 : vector<8x256xf32>
    %322 = arith.addf %7, %321 : vector<8x256xf32>
    %c0_163 = arith.constant 0 : index
    %c0_164 = arith.constant 0 : index
    %c0_165 = arith.constant 0 : index
    %323 = vector.load %arg7[%c0_163, %c0_164, %c0_165] : memref<8x8x256xbf16, #tpu.memory_space<vmem>>, vector<1x8x256xbf16>
    %324 = vector.shape_cast %323 : vector<1x8x256xbf16> to vector<8x256xbf16>
    %325 = arith.extf %324 : vector<8x256xbf16> to vector<8x256xf32>
    %326 = vector.broadcast %316 : f32 to vector<8x256xf32>
    %327 = arith.mulf %326, %325 : vector<8x256xf32>
    %328 = arith.addf %9, %327 : vector<8x256xf32>
    %c4_i32_166 = arith.constant 4 : i32
    %329 = arith.muli %arg0, %c4_i32_166 : i32
    %c2_i32_167 = arith.constant 2 : i32
    %330 = arith.addi %329, %c2_i32_167 : i32
    %c8_i32_168 = arith.constant 8 : i32
    %331 = arith.muli %330, %c8_i32_168 : i32
    %c1_i32_169 = arith.constant 1 : i32
    %332 = arith.addi %331, %c1_i32_169 : i32
    %333 = arith.index_cast %332 : i32 to index
    %334 = memref.load %arg1[%333] : memref<64xf32, #tpu.memory_space<smem>>
    %c1_170 = arith.constant 1 : index
    %c0_171 = arith.constant 0 : index
    %c0_172 = arith.constant 0 : index
    %335 = vector.load %arg5[%c1_170, %c0_171, %c0_172] : memref<8x8x256xbf16, #tpu.memory_space<vmem>>, vector<1x8x256xbf16>
    %336 = vector.shape_cast %335 : vector<1x8x256xbf16> to vector<8x256xbf16>
    %337 = arith.extf %336 : vector<8x256xbf16> to vector<8x256xf32>
    %338 = vector.broadcast %334 : f32 to vector<8x256xf32>
    %339 = arith.mulf %338, %337 : vector<8x256xf32>
    %340 = arith.addf %322, %339 : vector<8x256xf32>
    %c1_173 = arith.constant 1 : index
    %c0_174 = arith.constant 0 : index
    %c0_175 = arith.constant 0 : index
    %341 = vector.load %arg7[%c1_173, %c0_174, %c0_175] : memref<8x8x256xbf16, #tpu.memory_space<vmem>>, vector<1x8x256xbf16>
    %342 = vector.shape_cast %341 : vector<1x8x256xbf16> to vector<8x256xbf16>
    %343 = arith.extf %342 : vector<8x256xbf16> to vector<8x256xf32>
    %344 = vector.broadcast %334 : f32 to vector<8x256xf32>
    %345 = arith.mulf %344, %343 : vector<8x256xf32>
    %346 = arith.addf %328, %345 : vector<8x256xf32>
    %c4_i32_176 = arith.constant 4 : i32
    %347 = arith.muli %arg0, %c4_i32_176 : i32
    %c2_i32_177 = arith.constant 2 : i32
    %348 = arith.addi %347, %c2_i32_177 : i32
    %c8_i32_178 = arith.constant 8 : i32
    %349 = arith.muli %348, %c8_i32_178 : i32
    %c2_i32_179 = arith.constant 2 : i32
    %350 = arith.addi %349, %c2_i32_179 : i32
    %351 = arith.index_cast %350 : i32 to index
    %352 = memref.load %arg1[%351] : memref<64xf32, #tpu.memory_space<smem>>
    %c2_180 = arith.constant 2 : index
    %c0_181 = arith.constant 0 : index
    %c0_182 = arith.constant 0 : index
    %353 = vector.load %arg5[%c2_180, %c0_181, %c0_182] : memref<8x8x256xbf16, #tpu.memory_space<vmem>>, vector<1x8x256xbf16>
    %354 = vector.shape_cast %353 : vector<1x8x256xbf16> to vector<8x256xbf16>
    %355 = arith.extf %354 : vector<8x256xbf16> to vector<8x256xf32>
    %356 = vector.broadcast %352 : f32 to vector<8x256xf32>
    %357 = arith.mulf %356, %355 : vector<8x256xf32>
    %358 = arith.addf %340, %357 : vector<8x256xf32>
    %c2_183 = arith.constant 2 : index
    %c0_184 = arith.constant 0 : index
    %c0_185 = arith.constant 0 : index
    %359 = vector.load %arg7[%c2_183, %c0_184, %c0_185] : memref<8x8x256xbf16, #tpu.memory_space<vmem>>, vector<1x8x256xbf16>
    %360 = vector.shape_cast %359 : vector<1x8x256xbf16> to vector<8x256xbf16>
    %361 = arith.extf %360 : vector<8x256xbf16> to vector<8x256xf32>
    %362 = vector.broadcast %352 : f32 to vector<8x256xf32>
    %363 = arith.mulf %362, %361 : vector<8x256xf32>
    %364 = arith.addf %346, %363 : vector<8x256xf32>
    %c4_i32_186 = arith.constant 4 : i32
    %365 = arith.muli %arg0, %c4_i32_186 : i32
    %c2_i32_187 = arith.constant 2 : i32
    %366 = arith.addi %365, %c2_i32_187 : i32
    %c8_i32_188 = arith.constant 8 : i32
    %367 = arith.muli %366, %c8_i32_188 : i32
    %c3_i32_189 = arith.constant 3 : i32
    %368 = arith.addi %367, %c3_i32_189 : i32
    %369 = arith.index_cast %368 : i32 to index
    %370 = memref.load %arg1[%369] : memref<64xf32, #tpu.memory_space<smem>>
    %c3_190 = arith.constant 3 : index
    %c0_191 = arith.constant 0 : index
    %c0_192 = arith.constant 0 : index
    %371 = vector.load %arg5[%c3_190, %c0_191, %c0_192] : memref<8x8x256xbf16, #tpu.memory_space<vmem>>, vector<1x8x256xbf16>
    %372 = vector.shape_cast %371 : vector<1x8x256xbf16> to vector<8x256xbf16>
    %373 = arith.extf %372 : vector<8x256xbf16> to vector<8x256xf32>
    %374 = vector.broadcast %370 : f32 to vector<8x256xf32>
    %375 = arith.mulf %374, %373 : vector<8x256xf32>
    %376 = arith.addf %358, %375 : vector<8x256xf32>
    %c3_193 = arith.constant 3 : index
    %c0_194 = arith.constant 0 : index
    %c0_195 = arith.constant 0 : index
    %377 = vector.load %arg7[%c3_193, %c0_194, %c0_195] : memref<8x8x256xbf16, #tpu.memory_space<vmem>>, vector<1x8x256xbf16>
    %378 = vector.shape_cast %377 : vector<1x8x256xbf16> to vector<8x256xbf16>
    %379 = arith.extf %378 : vector<8x256xbf16> to vector<8x256xf32>
    %380 = vector.broadcast %370 : f32 to vector<8x256xf32>
    %381 = arith.mulf %380, %379 : vector<8x256xf32>
    %382 = arith.addf %364, %381 : vector<8x256xf32>
    %c4_i32_196 = arith.constant 4 : i32
    %383 = arith.muli %arg0, %c4_i32_196 : i32
    %c2_i32_197 = arith.constant 2 : i32
    %384 = arith.addi %383, %c2_i32_197 : i32
    %c8_i32_198 = arith.constant 8 : i32
    %385 = arith.muli %384, %c8_i32_198 : i32
    %c4_i32_199 = arith.constant 4 : i32
    %386 = arith.addi %385, %c4_i32_199 : i32
    %387 = arith.index_cast %386 : i32 to index
    %388 = memref.load %arg1[%387] : memref<64xf32, #tpu.memory_space<smem>>
    %c4_200 = arith.constant 4 : index
    %c0_201 = arith.constant 0 : index
    %c0_202 = arith.constant 0 : index
    %389 = vector.load %arg5[%c4_200, %c0_201, %c0_202] : memref<8x8x256xbf16, #tpu.memory_space<vmem>>, vector<1x8x256xbf16>
    %390 = vector.shape_cast %389 : vector<1x8x256xbf16> to vector<8x256xbf16>
    %391 = arith.extf %390 : vector<8x256xbf16> to vector<8x256xf32>
    %392 = vector.broadcast %388 : f32 to vector<8x256xf32>
    %393 = arith.mulf %392, %391 : vector<8x256xf32>
    %394 = arith.addf %376, %393 : vector<8x256xf32>
    %c4_203 = arith.constant 4 : index
    %c0_204 = arith.constant 0 : index
    %c0_205 = arith.constant 0 : index
    %395 = vector.load %arg7[%c4_203, %c0_204, %c0_205] : memref<8x8x256xbf16, #tpu.memory_space<vmem>>, vector<1x8x256xbf16>
    %396 = vector.shape_cast %395 : vector<1x8x256xbf16> to vector<8x256xbf16>
    %397 = arith.extf %396 : vector<8x256xbf16> to vector<8x256xf32>
    %398 = vector.broadcast %388 : f32 to vector<8x256xf32>
    %399 = arith.mulf %398, %397 : vector<8x256xf32>
    %400 = arith.addf %382, %399 : vector<8x256xf32>
    %c4_i32_206 = arith.constant 4 : i32
    %401 = arith.muli %arg0, %c4_i32_206 : i32
    %c2_i32_207 = arith.constant 2 : i32
    %402 = arith.addi %401, %c2_i32_207 : i32
    %c8_i32_208 = arith.constant 8 : i32
    %403 = arith.muli %402, %c8_i32_208 : i32
    %c5_i32_209 = arith.constant 5 : i32
    %404 = arith.addi %403, %c5_i32_209 : i32
    %405 = arith.index_cast %404 : i32 to index
    %406 = memref.load %arg1[%405] : memref<64xf32, #tpu.memory_space<smem>>
    %c5_210 = arith.constant 5 : index
    %c0_211 = arith.constant 0 : index
    %c0_212 = arith.constant 0 : index
    %407 = vector.load %arg5[%c5_210, %c0_211, %c0_212] : memref<8x8x256xbf16, #tpu.memory_space<vmem>>, vector<1x8x256xbf16>
    %408 = vector.shape_cast %407 : vector<1x8x256xbf16> to vector<8x256xbf16>
    %409 = arith.extf %408 : vector<8x256xbf16> to vector<8x256xf32>
    %410 = vector.broadcast %406 : f32 to vector<8x256xf32>
    %411 = arith.mulf %410, %409 : vector<8x256xf32>
    %412 = arith.addf %394, %411 : vector<8x256xf32>
    %c5_213 = arith.constant 5 : index
    %c0_214 = arith.constant 0 : index
    %c0_215 = arith.constant 0 : index
    %413 = vector.load %arg7[%c5_213, %c0_214, %c0_215] : memref<8x8x256xbf16, #tpu.memory_space<vmem>>, vector<1x8x256xbf16>
    %414 = vector.shape_cast %413 : vector<1x8x256xbf16> to vector<8x256xbf16>
    %415 = arith.extf %414 : vector<8x256xbf16> to vector<8x256xf32>
    %416 = vector.broadcast %406 : f32 to vector<8x256xf32>
    %417 = arith.mulf %416, %415 : vector<8x256xf32>
    %418 = arith.addf %400, %417 : vector<8x256xf32>
    %c4_i32_216 = arith.constant 4 : i32
    %419 = arith.muli %arg0, %c4_i32_216 : i32
    %c2_i32_217 = arith.constant 2 : i32
    %420 = arith.addi %419, %c2_i32_217 : i32
    %c8_i32_218 = arith.constant 8 : i32
    %421 = arith.muli %420, %c8_i32_218 : i32
    %c6_i32_219 = arith.constant 6 : i32
    %422 = arith.addi %421, %c6_i32_219 : i32
    %423 = arith.index_cast %422 : i32 to index
    %424 = memref.load %arg1[%423] : memref<64xf32, #tpu.memory_space<smem>>
    %c6_220 = arith.constant 6 : index
    %c0_221 = arith.constant 0 : index
    %c0_222 = arith.constant 0 : index
    %425 = vector.load %arg5[%c6_220, %c0_221, %c0_222] : memref<8x8x256xbf16, #tpu.memory_space<vmem>>, vector<1x8x256xbf16>
    %426 = vector.shape_cast %425 : vector<1x8x256xbf16> to vector<8x256xbf16>
    %427 = arith.extf %426 : vector<8x256xbf16> to vector<8x256xf32>
    %428 = vector.broadcast %424 : f32 to vector<8x256xf32>
    %429 = arith.mulf %428, %427 : vector<8x256xf32>
    %430 = arith.addf %412, %429 : vector<8x256xf32>
    %c6_223 = arith.constant 6 : index
    %c0_224 = arith.constant 0 : index
    %c0_225 = arith.constant 0 : index
    %431 = vector.load %arg7[%c6_223, %c0_224, %c0_225] : memref<8x8x256xbf16, #tpu.memory_space<vmem>>, vector<1x8x256xbf16>
    %432 = vector.shape_cast %431 : vector<1x8x256xbf16> to vector<8x256xbf16>
    %433 = arith.extf %432 : vector<8x256xbf16> to vector<8x256xf32>
    %434 = vector.broadcast %424 : f32 to vector<8x256xf32>
    %435 = arith.mulf %434, %433 : vector<8x256xf32>
    %436 = arith.addf %418, %435 : vector<8x256xf32>
    %c4_i32_226 = arith.constant 4 : i32
    %437 = arith.muli %arg0, %c4_i32_226 : i32
    %c2_i32_227 = arith.constant 2 : i32
    %438 = arith.addi %437, %c2_i32_227 : i32
    %c8_i32_228 = arith.constant 8 : i32
    %439 = arith.muli %438, %c8_i32_228 : i32
    %c7_i32_229 = arith.constant 7 : i32
    %440 = arith.addi %439, %c7_i32_229 : i32
    %441 = arith.index_cast %440 : i32 to index
    %442 = memref.load %arg1[%441] : memref<64xf32, #tpu.memory_space<smem>>
    %c7_230 = arith.constant 7 : index
    %c0_231 = arith.constant 0 : index
    %c0_232 = arith.constant 0 : index
    %443 = vector.load %arg5[%c7_230, %c0_231, %c0_232] : memref<8x8x256xbf16, #tpu.memory_space<vmem>>, vector<1x8x256xbf16>
    %444 = vector.shape_cast %443 : vector<1x8x256xbf16> to vector<8x256xbf16>
    %445 = arith.extf %444 : vector<8x256xbf16> to vector<8x256xf32>
    %446 = vector.broadcast %442 : f32 to vector<8x256xf32>
    %447 = arith.mulf %446, %445 : vector<8x256xf32>
    %448 = arith.addf %430, %447 : vector<8x256xf32>
    %c7_233 = arith.constant 7 : index
    %c0_234 = arith.constant 0 : index
    %c0_235 = arith.constant 0 : index
    %449 = vector.load %arg7[%c7_233, %c0_234, %c0_235] : memref<8x8x256xbf16, #tpu.memory_space<vmem>>, vector<1x8x256xbf16>
    %450 = vector.shape_cast %449 : vector<1x8x256xbf16> to vector<8x256xbf16>
    %451 = arith.extf %450 : vector<8x256xbf16> to vector<8x256xf32>
    %452 = vector.broadcast %442 : f32 to vector<8x256xf32>
    %453 = arith.mulf %452, %451 : vector<8x256xf32>
    %454 = arith.addf %436, %453 : vector<8x256xf32>
    %455 = arith.cmpf ogt, %310, %448 : vector<8x256xf32>
    %456 = arith.mulf %454, %310 : vector<8x256xf32>
    %457 = arith.addf %456, %448 : vector<8x256xf32>
    %458 = arith.select %455, %310, %457 : vector<8x256xi1>, vector<8x256xf32>
    %c0_236 = arith.constant 0 : index
    %c512 = arith.constant 512 : index
    %459 = vector.load %arg9[%c0_236, %c512] : memref<8x1024xf32, #tpu.memory_space<vmem>>, vector<8x256xf32>
    tpu.vector_store %arg9[%c0_236, %c512], %458 {strides = array<i32>} : memref<8x1024xf32, #tpu.memory_space<vmem>>, vector<8x256xf32>,
    %460 = vector.extract_strided_slice %5 {offsets = [0, 768], sizes = [8, 256], strides = [1, 1]} : vector<8x1024xf32> to vector<8x256xf32>
    %c4_i32_237 = arith.constant 4 : i32
    %461 = arith.muli %arg0, %c4_i32_237 : i32
    %c3_i32_238 = arith.constant 3 : i32
    %462 = arith.addi %461, %c3_i32_238 : i32
    %c8_i32_239 = arith.constant 8 : i32
    %463 = arith.muli %462, %c8_i32_239 : i32
    %c0_i32_240 = arith.constant 0 : i32
    %464 = arith.addi %463, %c0_i32_240 : i32
    %465 = arith.index_cast %464 : i32 to index
    %466 = memref.load %arg1[%465] : memref<64xf32, #tpu.memory_space<smem>>
    %c0_241 = arith.constant 0 : index
    %c0_242 = arith.constant 0 : index
    %c0_243 = arith.constant 0 : index
    %467 = vector.load %arg5[%c0_241, %c0_242, %c0_243] : memref<8x8x256xbf16, #tpu.memory_space<vmem>>, vector<1x8x256xbf16>
    %468 = vector.shape_cast %467 : vector<1x8x256xbf16> to vector<8x256xbf16>
    %469 = arith.extf %468 : vector<8x256xbf16> to vector<8x256xf32>
    %470 = vector.broadcast %466 : f32 to vector<8x256xf32>
    %471 = arith.mulf %470, %469 : vector<8x256xf32>
    %472 = arith.addf %7, %471 : vector<8x256xf32>
    %c0_244 = arith.constant 0 : index
    %c0_245 = arith.constant 0 : index
    %c0_246 = arith.constant 0 : index
    %473 = vector.load %arg7[%c0_244, %c0_245, %c0_246] : memref<8x8x256xbf16, #tpu.memory_space<vmem>>, vector<1x8x256xbf16>
    %474 = vector.shape_cast %473 : vector<1x8x256xbf16> to vector<8x256xbf16>
    %475 = arith.extf %474 : vector<8x256xbf16> to vector<8x256xf32>
    %476 = vector.broadcast %466 : f32 to vector<8x256xf32>
    %477 = arith.mulf %476, %475 : vector<8x256xf32>
    %478 = arith.addf %9, %477 : vector<8x256xf32>
    %c4_i32_247 = arith.constant 4 : i32
    %479 = arith.muli %arg0, %c4_i32_247 : i32
    %c3_i32_248 = arith.constant 3 : i32
    %480 = arith.addi %479, %c3_i32_248 : i32
    %c8_i32_249 = arith.constant 8 : i32
    %481 = arith.muli %480, %c8_i32_249 : i32
    %c1_i32_250 = arith.constant 1 : i32
    %482 = arith.addi %481, %c1_i32_250 : i32
    %483 = arith.index_cast %482 : i32 to index
    %484 = memref.load %arg1[%483] : memref<64xf32, #tpu.memory_space<smem>>
    %c1_251 = arith.constant 1 : index
    %c0_252 = arith.constant 0 : index
    %c0_253 = arith.constant 0 : index
    %485 = vector.load %arg5[%c1_251, %c0_252, %c0_253] : memref<8x8x256xbf16, #tpu.memory_space<vmem>>, vector<1x8x256xbf16>
    %486 = vector.shape_cast %485 : vector<1x8x256xbf16> to vector<8x256xbf16>
    %487 = arith.extf %486 : vector<8x256xbf16> to vector<8x256xf32>
    %488 = vector.broadcast %484 : f32 to vector<8x256xf32>
    %489 = arith.mulf %488, %487 : vector<8x256xf32>
    %490 = arith.addf %472, %489 : vector<8x256xf32>
    %c1_254 = arith.constant 1 : index
    %c0_255 = arith.constant 0 : index
    %c0_256 = arith.constant 0 : index
    %491 = vector.load %arg7[%c1_254, %c0_255, %c0_256] : memref<8x8x256xbf16, #tpu.memory_space<vmem>>, vector<1x8x256xbf16>
    %492 = vector.shape_cast %491 : vector<1x8x256xbf16> to vector<8x256xbf16>
    %493 = arith.extf %492 : vector<8x256xbf16> to vector<8x256xf32>
    %494 = vector.broadcast %484 : f32 to vector<8x256xf32>
    %495 = arith.mulf %494, %493 : vector<8x256xf32>
    %496 = arith.addf %478, %495 : vector<8x256xf32>
    %c4_i32_257 = arith.constant 4 : i32
    %497 = arith.muli %arg0, %c4_i32_257 : i32
    %c3_i32_258 = arith.constant 3 : i32
    %498 = arith.addi %497, %c3_i32_258 : i32
    %c8_i32_259 = arith.constant 8 : i32
    %499 = arith.muli %498, %c8_i32_259 : i32
    %c2_i32_260 = arith.constant 2 : i32
    %500 = arith.addi %499, %c2_i32_260 : i32
    %501 = arith.index_cast %500 : i32 to index
    %502 = memref.load %arg1[%501] : memref<64xf32, #tpu.memory_space<smem>>
    %c2_261 = arith.constant 2 : index
    %c0_262 = arith.constant 0 : index
    %c0_263 = arith.constant 0 : index
    %503 = vector.load %arg5[%c2_261, %c0_262, %c0_263] : memref<8x8x256xbf16, #tpu.memory_space<vmem>>, vector<1x8x256xbf16>
    %504 = vector.shape_cast %503 : vector<1x8x256xbf16> to vector<8x256xbf16>
    %505 = arith.extf %504 : vector<8x256xbf16> to vector<8x256xf32>
    %506 = vector.broadcast %502 : f32 to vector<8x256xf32>
    %507 = arith.mulf %506, %505 : vector<8x256xf32>
    %508 = arith.addf %490, %507 : vector<8x256xf32>
    %c2_264 = arith.constant 2 : index
    %c0_265 = arith.constant 0 : index
    %c0_266 = arith.constant 0 : index
    %509 = vector.load %arg7[%c2_264, %c0_265, %c0_266] : memref<8x8x256xbf16, #tpu.memory_space<vmem>>, vector<1x8x256xbf16>
    %510 = vector.shape_cast %509 : vector<1x8x256xbf16> to vector<8x256xbf16>
    %511 = arith.extf %510 : vector<8x256xbf16> to vector<8x256xf32>
    %512 = vector.broadcast %502 : f32 to vector<8x256xf32>
    %513 = arith.mulf %512, %511 : vector<8x256xf32>
    %514 = arith.addf %496, %513 : vector<8x256xf32>
    %c4_i32_267 = arith.constant 4 : i32
    %515 = arith.muli %arg0, %c4_i32_267 : i32
    %c3_i32_268 = arith.constant 3 : i32
    %516 = arith.addi %515, %c3_i32_268 : i32
    %c8_i32_269 = arith.constant 8 : i32
    %517 = arith.muli %516, %c8_i32_269 : i32
    %c3_i32_270 = arith.constant 3 : i32
    %518 = arith.addi %517, %c3_i32_270 : i32
    %519 = arith.index_cast %518 : i32 to index
    %520 = memref.load %arg1[%519] : memref<64xf32, #tpu.memory_space<smem>>
    %c3_271 = arith.constant 3 : index
    %c0_272 = arith.constant 0 : index
    %c0_273 = arith.constant 0 : index
    %521 = vector.load %arg5[%c3_271, %c0_272, %c0_273] : memref<8x8x256xbf16, #tpu.memory_space<vmem>>, vector<1x8x256xbf16>
    %522 = vector.shape_cast %521 : vector<1x8x256xbf16> to vector<8x256xbf16>
    %523 = arith.extf %522 : vector<8x256xbf16> to vector<8x256xf32>
    %524 = vector.broadcast %520 : f32 to vector<8x256xf32>
    %525 = arith.mulf %524, %523 : vector<8x256xf32>
    %526 = arith.addf %508, %525 : vector<8x256xf32>
    %c3_274 = arith.constant 3 : index
    %c0_275 = arith.constant 0 : index
    %c0_276 = arith.constant 0 : index
    %527 = vector.load %arg7[%c3_274, %c0_275, %c0_276] : memref<8x8x256xbf16, #tpu.memory_space<vmem>>, vector<1x8x256xbf16>
    %528 = vector.shape_cast %527 : vector<1x8x256xbf16> to vector<8x256xbf16>
    %529 = arith.extf %528 : vector<8x256xbf16> to vector<8x256xf32>
    %530 = vector.broadcast %520 : f32 to vector<8x256xf32>
    %531 = arith.mulf %530, %529 : vector<8x256xf32>
    %532 = arith.addf %514, %531 : vector<8x256xf32>
    %c4_i32_277 = arith.constant 4 : i32
    %533 = arith.muli %arg0, %c4_i32_277 : i32
    %c3_i32_278 = arith.constant 3 : i32
    %534 = arith.addi %533, %c3_i32_278 : i32
    %c8_i32_279 = arith.constant 8 : i32
    %535 = arith.muli %534, %c8_i32_279 : i32
    %c4_i32_280 = arith.constant 4 : i32
    %536 = arith.addi %535, %c4_i32_280 : i32
    %537 = arith.index_cast %536 : i32 to index
    %538 = memref.load %arg1[%537] : memref<64xf32, #tpu.memory_space<smem>>
    %c4_281 = arith.constant 4 : index
    %c0_282 = arith.constant 0 : index
    %c0_283 = arith.constant 0 : index
    %539 = vector.load %arg5[%c4_281, %c0_282, %c0_283] : memref<8x8x256xbf16, #tpu.memory_space<vmem>>, vector<1x8x256xbf16>
    %540 = vector.shape_cast %539 : vector<1x8x256xbf16> to vector<8x256xbf16>
    %541 = arith.extf %540 : vector<8x256xbf16> to vector<8x256xf32>
    %542 = vector.broadcast %538 : f32 to vector<8x256xf32>
    %543 = arith.mulf %542, %541 : vector<8x256xf32>
    %544 = arith.addf %526, %543 : vector<8x256xf32>
    %c4_284 = arith.constant 4 : index
    %c0_285 = arith.constant 0 : index
    %c0_286 = arith.constant 0 : index
    %545 = vector.load %arg7[%c4_284, %c0_285, %c0_286] : memref<8x8x256xbf16, #tpu.memory_space<vmem>>, vector<1x8x256xbf16>
    %546 = vector.shape_cast %545 : vector<1x8x256xbf16> to vector<8x256xbf16>
    %547 = arith.extf %546 : vector<8x256xbf16> to vector<8x256xf32>
    %548 = vector.broadcast %538 : f32 to vector<8x256xf32>
    %549 = arith.mulf %548, %547 : vector<8x256xf32>
    %550 = arith.addf %532, %549 : vector<8x256xf32>
    %c4_i32_287 = arith.constant 4 : i32
    %551 = arith.muli %arg0, %c4_i32_287 : i32
    %c3_i32_288 = arith.constant 3 : i32
    %552 = arith.addi %551, %c3_i32_288 : i32
    %c8_i32_289 = arith.constant 8 : i32
    %553 = arith.muli %552, %c8_i32_289 : i32
    %c5_i32_290 = arith.constant 5 : i32
    %554 = arith.addi %553, %c5_i32_290 : i32
    %555 = arith.index_cast %554 : i32 to index
    %556 = memref.load %arg1[%555] : memref<64xf32, #tpu.memory_space<smem>>
    %c5_291 = arith.constant 5 : index
    %c0_292 = arith.constant 0 : index
    %c0_293 = arith.constant 0 : index
    %557 = vector.load %arg5[%c5_291, %c0_292, %c0_293] : memref<8x8x256xbf16, #tpu.memory_space<vmem>>, vector<1x8x256xbf16>
    %558 = vector.shape_cast %557 : vector<1x8x256xbf16> to vector<8x256xbf16>
    %559 = arith.extf %558 : vector<8x256xbf16> to vector<8x256xf32>
    %560 = vector.broadcast %556 : f32 to vector<8x256xf32>
    %561 = arith.mulf %560, %559 : vector<8x256xf32>
    %562 = arith.addf %544, %561 : vector<8x256xf32>
    %c5_294 = arith.constant 5 : index
    %c0_295 = arith.constant 0 : index
    %c0_296 = arith.constant 0 : index
    %563 = vector.load %arg7[%c5_294, %c0_295, %c0_296] : memref<8x8x256xbf16, #tpu.memory_space<vmem>>, vector<1x8x256xbf16>
    %564 = vector.shape_cast %563 : vector<1x8x256xbf16> to vector<8x256xbf16>
    %565 = arith.extf %564 : vector<8x256xbf16> to vector<8x256xf32>
    %566 = vector.broadcast %556 : f32 to vector<8x256xf32>
    %567 = arith.mulf %566, %565 : vector<8x256xf32>
    %568 = arith.addf %550, %567 : vector<8x256xf32>
    %c4_i32_297 = arith.constant 4 : i32
    %569 = arith.muli %arg0, %c4_i32_297 : i32
    %c3_i32_298 = arith.constant 3 : i32
    %570 = arith.addi %569, %c3_i32_298 : i32
    %c8_i32_299 = arith.constant 8 : i32
    %571 = arith.muli %570, %c8_i32_299 : i32
    %c6_i32_300 = arith.constant 6 : i32
    %572 = arith.addi %571, %c6_i32_300 : i32
    %573 = arith.index_cast %572 : i32 to index
    %574 = memref.load %arg1[%573] : memref<64xf32, #tpu.memory_space<smem>>
    %c6_301 = arith.constant 6 : index
    %c0_302 = arith.constant 0 : index
    %c0_303 = arith.constant 0 : index
    %575 = vector.load %arg5[%c6_301, %c0_302, %c0_303] : memref<8x8x256xbf16, #tpu.memory_space<vmem>>, vector<1x8x256xbf16>
    %576 = vector.shape_cast %575 : vector<1x8x256xbf16> to vector<8x256xbf16>
    %577 = arith.extf %576 : vector<8x256xbf16> to vector<8x256xf32>
    %578 = vector.broadcast %574 : f32 to vector<8x256xf32>
    %579 = arith.mulf %578, %577 : vector<8x256xf32>
    %580 = arith.addf %562, %579 : vector<8x256xf32>
    %c6_304 = arith.constant 6 : index
    %c0_305 = arith.constant 0 : index
    %c0_306 = arith.constant 0 : index
    %581 = vector.load %arg7[%c6_304, %c0_305, %c0_306] : memref<8x8x256xbf16, #tpu.memory_space<vmem>>, vector<1x8x256xbf16>
    %582 = vector.shape_cast %581 : vector<1x8x256xbf16> to vector<8x256xbf16>
    %583 = arith.extf %582 : vector<8x256xbf16> to vector<8x256xf32>
    %584 = vector.broadcast %574 : f32 to vector<8x256xf32>
    %585 = arith.mulf %584, %583 : vector<8x256xf32>
    %586 = arith.addf %568, %585 : vector<8x256xf32>
    %c4_i32_307 = arith.constant 4 : i32
    %587 = arith.muli %arg0, %c4_i32_307 : i32
    %c3_i32_308 = arith.constant 3 : i32
    %588 = arith.addi %587, %c3_i32_308 : i32
    %c8_i32_309 = arith.constant 8 : i32
    %589 = arith.muli %588, %c8_i32_309 : i32
    %c7_i32_310 = arith.constant 7 : i32
    %590 = arith.addi %589, %c7_i32_310 : i32
    %591 = arith.index_cast %590 : i32 to index
    %592 = memref.load %arg1[%591] : memref<64xf32, #tpu.memory_space<smem>>
    %c7_311 = arith.constant 7 : index
    %c0_312 = arith.constant 0 : index
    %c0_313 = arith.constant 0 : index
    %593 = vector.load %arg5[%c7_311, %c0_312, %c0_313] : memref<8x8x256xbf16, #tpu.memory_space<vmem>>, vector<1x8x256xbf16>
    %594 = vector.shape_cast %593 : vector<1x8x256xbf16> to vector<8x256xbf16>
    %595 = arith.extf %594 : vector<8x256xbf16> to vector<8x256xf32>
    %596 = vector.broadcast %592 : f32 to vector<8x256xf32>
    %597 = arith.mulf %596, %595 : vector<8x256xf32>
    %598 = arith.addf %580, %597 : vector<8x256xf32>
    %c7_314 = arith.constant 7 : index
    %c0_315 = arith.constant 0 : index
    %c0_316 = arith.constant 0 : index
    %599 = vector.load %arg7[%c7_314, %c0_315, %c0_316] : memref<8x8x256xbf16, #tpu.memory_space<vmem>>, vector<1x8x256xbf16>
    %600 = vector.shape_cast %599 : vector<1x8x256xbf16> to vector<8x256xbf16>
    %601 = arith.extf %600 : vector<8x256xbf16> to vector<8x256xf32>
    %602 = vector.broadcast %592 : f32 to vector<8x256xf32>
    %603 = arith.mulf %602, %601 : vector<8x256xf32>
    %604 = arith.addf %586, %603 : vector<8x256xf32>
    %605 = arith.cmpf ogt, %460, %598 : vector<8x256xf32>
    %606 = arith.mulf %604, %460 : vector<8x256xf32>
    %607 = arith.addf %606, %598 : vector<8x256xf32>
    %608 = arith.select %605, %460, %607 : vector<8x256xi1>, vector<8x256xf32>
    %c0_317 = arith.constant 0 : index
    %c768 = arith.constant 768 : index
    %609 = vector.load %arg9[%c0_317, %c768] : memref<8x1024xf32, #tpu.memory_space<vmem>>, vector<8x256xf32>
    tpu.vector_store %arg9[%c0_317, %c768], %608 {strides = array<i32>} : memref<8x1024xf32, #tpu.memory_space<vmem>>, vector<8x256xf32>,
    return
  }
  func.func @transform_0(%arg0: i32) -> i32 {
    %c0_i32 = arith.constant 0 : i32
    %c0_i32_0 = arith.constant 0 : i32
    return %c0_i32 : i32
  }
  func.func @transform_1(%arg0: i32) -> (i32, i32) {
    %c0_i32 = arith.constant 0 : i32
    %c0_i32_0 = arith.constant 0 : i32
    return %c0_i32, %arg0 : i32, i32
  }
  func.func @transform_2(%arg0: i32) -> (i32, i32) {
    %c0_i32 = arith.constant 0 : i32
    %c0_i32_0 = arith.constant 0 : i32
    %c0_i32_1 = arith.constant 0 : i32
    return %c0_i32, %c0_i32_0 : i32, i32
  }
  func.func @transform_3(%arg0: i32) -> (i32, i32) {
    %c0_i32 = arith.constant 0 : i32
    %c0_i32_0 = arith.constant 0 : i32
    %c0_i32_1 = arith.constant 0 : i32
    return %c0_i32, %c0_i32_0 : i32, i32
  }
  func.func @transform_4(%arg0: i32) -> (i32, i32, i32) {
    %c0_i32 = arith.constant 0 : i32
    %c0_i32_0 = arith.constant 0 : i32
    %c0_i32_1 = arith.constant 0 : i32
    %c0_i32_2 = arith.constant 0 : i32
    return %c0_i32, %c0_i32_0, %c0_i32_1 : i32, i32, i32
  }
  func.func @transform_5(%arg0: i32) -> (i32, i32) {
    %c0_i32 = arith.constant 0 : i32
    %c0_i32_0 = arith.constant 0 : i32
    %c0_i32_1 = arith.constant 0 : i32
    return %c0_i32, %c0_i32_0 : i32, i32
  }
  func.func @transform_6(%arg0: i32) -> (i32, i32, i32) {
    %c0_i32 = arith.constant 0 : i32
    %c0_i32_0 = arith.constant 0 : i32
    %c0_i32_1 = arith.constant 0 : i32
    %c0_i32_2 = arith.constant 0 : i32
    return %c0_i32, %c0_i32_0, %c0_i32_1 : i32, i32, i32
  }
  func.func @transform_7(%arg0: i32) -> (i32, i32) {
    %c0_i32 = arith.constant 0 : i32
    %c0_i32_0 = arith.constant 0 : i32
    %c0_i32_1 = arith.constant 0 : i32
    return %c0_i32, %c0_i32_0 : i32, i32
  }
  func.func @transform_8(%arg0: i32) -> (i32, i32) {
    %c0_i32 = arith.constant 0 : i32
    %c0_i32_0 = arith.constant 0 : i32
    return %c0_i32, %arg0 : i32, i32
  }
}

</mosaic_0001>

<llo_original>
// kernel: tpu_custom_call.1
$region0: #{tpu_custom_call.1}
  #allocation0 [shape = 'u32[]', space=smem, size = 0x4, offset = 0x4, fixed_abs, tag = 'smem constant byte address 0x4 - core index']
  #allocation1 [shape = 'u32[144,128]{1,0:T(1,128)}', space=vmem, size = 0x12000, scoped, tag = 'internal scratch']
  %s0 = inlined_call_operand.hbm [shape: f32[64], index: 0, kind: input, shape index: {}]
  %s1 = inlined_call_operand.hbm [shape: bf16[36,2048], index: 1, kind: input, shape index: {}]
  %s2 = inlined_call_operand.hbm [shape: bf16[8,36], index: 2, kind: input, shape index: {}]
  %s3 = inlined_call_operand.vmem [shape: f32[8,1], index: 3, kind: input, shape index: {}]
  %s4 = inlined_call_operand.hbm [shape: bf16[8,8,256], index: 4, kind: input, shape index: {}]
  %s5 = inlined_call_operand.vmem [shape: bf16[8,256], index: 5, kind: input, shape index: {}]
  %s6 = inlined_call_operand.hbm [shape: bf16[8,8,256], index: 6, kind: input, shape index: {}]
  %s7 = inlined_call_operand.vmem [shape: bf16[8,256], index: 7, kind: input, shape index: {}]
  %s8 = inlined_call_operand.hbm [shape: f32[8,2048], index: 8, kind: output, shape index: {}]
  %s9 = sld [smem:[#allocation0]]
  $region85: #{tpu_custom_call.1} parent=0
    _
  %s11 = ssub.s32 1, %s9
  %s12 = scalar_select 0, %s11, %s9
  $region1: #{tpu_custom_call.1} parent=0
    #allocation2 [shape = 'u8[512]{0}', space=smem, size = 0x200, scoped, tag = 'input window, operand 0, single buffered']
    #allocation3 [shape = 's32[2]{0}', space=sflag, size = 0x8, scoped, tag = 'scoped memory for tpu_custom_call.1']
    #allocation4 [shape = 's32[2]{0}', space=sflag, size = 0x8, scoped, tag = 'scoped memory for tpu_custom_call.1']
    #allocation5 [shape = 's32[2]{0}', space=sflag, size = 0x8, scoped, tag = 'scoped memory for tpu_custom_call.1']
    #allocation6 [shape = 'u8[163840]{0}', space=vmem, size = 0x28000, scoped, tag = 'input window, operand 1']
    #allocation7 [shape = 'u8[2048]{0}', space=vmem, size = 0x800, scoped, tag = 'input window, operand 2, single buffered']
    #allocation8 [shape = 's32[1]{0}', space=sflag, size = 0x4, scoped, tag = 'scoped memory for tpu_custom_call.1']
    #allocation9 [shape = 'u8[32768]{0}', space=vmem, size = 0x8000, scoped, tag = 'input window, operand 4, single buffered']
    #allocation10 [shape = 'u8[32768]{0}', space=vmem, size = 0x8000, scoped, tag = 'input window, operand 6, single buffered']
    #allocation11 [shape = 's32[1]{0}', space=sflag, size = 0x4, scoped, tag = 'scoped memory for tpu_custom_call.1']
    #allocation12 [shape = 'u8[65536]{0}', space=vmem, size = 0x10000, scoped, tag = 'output window, operand 0']
    %13 = vsyncpa [#allocation5], 0
    %14 = vsyncpa [#allocation3], 0
    %s15 = scalar_lea.sflag [#allocation3], 1
    %16 = vsyncpa %s15, 0
    %17 = vsyncpa [#allocation8], 0
    %18 = vsyncpa [#allocation11], 0
    %19 = vsyncpa [#allocation4], 0
    %s20 = scalar_lea.sflag [#allocation4], 1
    %21 = vsyncpa %s20, 0
    loop: start=0, step=1, limit=4
    $region2: #{tpu_custom_call.1} parent=1 // loop_pre_header
      _
    $region3: #{tpu_custom_call.1} parent=1 // loop_header
      %s23 = sphi 0, %s27
      %p24 = scmp.ge.s32.totalorder %s23, 4
      %s31 = sphi 0, %s31
      %s33 = sphi 0, %s31
      %s34 = sphi 0, %s33
      %s48 = sphi 0, %s34
      %s54 = sphi 0, %s56
      %s57 = sphi 0, %s54
      %s58 = sphi 0, %s57
      %s74 = sphi 0, %s58
      %s78 = sphi 0, %s78
      %s80 = sphi 0, %s78
      %s81 = sphi 0, %s80
      %s95 = sphi 0, %s81
      %s99 = sphi 0, %s99
      %s101 = sphi 0, %s99
      %s102 = sphi 0, %s101
      %s116 = sphi 0, %s102
      %s120 = sphi 0, %s120
      %s122 = sphi 0, %s120
      %s123 = sphi 0, %s122
      %s137 = sphi 0, %s123
      %s141 = sphi 0, %s141
      %s143 = sphi 0, %s141
      %s144 = sphi 0, %s143
      %s158 = sphi 0, %s144
      %s162 = sphi 0, %s162
      %s164 = sphi 0, %s162
      %s165 = sphi 0, %s164
      %s179 = sphi 0, %s165
      %s183 = sphi 0, %s183
      %s185 = sphi 0, %s183
      %s186 = sphi 0, %s185
      %s200 = sphi 0, %s186
      %s206 = sphi 0, %s208
      %s209 = sphi 0, %s206
      %s210 = sphi 0, %s209
      %s226 = sphi 0, %s210
    $region4: #{tpu_custom_call.1} parent=1 // loop_header_branch
      %26 = sbr.rel (%p24) target = $region8
    $region5: #{tpu_custom_call.1} parent=1 // loop_body
      %s28 = ssub.s32 %s23, 1
      %s29 = ssub.s32 %s23, 2
      %s30 = sadd.s32 %s23, 1
      %s32 = sadd.s32 %s31, 1
      %p35 = scmp.eq.s32.totalorder %s23, 1
      %p36 = scmp.ne.s32.totalorder %s31, %s33
      %p37 = scmp.eq.s32.totalorder %s23, 0
      %p38 = por %p36, %p37
      %p39 = scmp.ne.s32.totalorder %s31, %s33
      %p40 = scmp.eq.s32.totalorder %s28, 1
      %p41 = por %p39, %p40
      %p42 = scmp.ne.s32.totalorder %s33, %s34
      %p43 = scmp.eq.s32.totalorder %s28, 0
      %p44 = por %p42, %p43
      %p45 = scmp.ne.s32.totalorder %s33, %s34
      %p46 = scmp.eq.s32.totalorder %s29, 1
      %p47 = por %p45, %p46
      %p49 = scmp.ne.s32.totalorder %s34, %s48
      %p50 = scmp.eq.s32.totalorder %s29, 0
      %p51 = por %p49, %p50
      %s52 = ssub.s32 %s23, %s30
      %p53 = scmp.eq.s32.totalorder %s52, 0
      %s55 = sadd.s32 %s54, 1
      %s56 = scalar_select %p53, %s54, %s55
      %p59 = pneg %p53
      %p60 = scmp.eq.s32.totalorder %s23, 1
      %p61 = por %p59, %p60
      %p62 = scmp.ne.s32.totalorder %s54, %s57
      %p63 = scmp.eq.s32.totalorder %s23, 0
      %p64 = por %p62, %p63
      %p65 = scmp.ne.s32.totalorder %s54, %s57
      %p66 = scmp.eq.s32.totalorder %s28, 1
      %p67 = por %p65, %p66
      %p68 = scmp.ne.s32.totalorder %s57, %s58
      %p69 = scmp.eq.s32.totalorder %s28, 0
      %p70 = por %p68, %p69
      %p71 = scmp.ne.s32.totalorder %s57, %s58
      %p72 = scmp.eq.s32.totalorder %s29, 1
      %p73 = por %p71, %p72
      %p75 = scmp.ne.s32.totalorder %s58, %s74
      %p76 = scmp.eq.s32.totalorder %s29, 0
      %p77 = por %p75, %p76
      %s79 = sadd.s32 %s78, 1
      %p82 = scmp.eq.s32.totalorder %s23, 1
      %p83 = scmp.ne.s32.totalorder %s78, %s80
      %p84 = scmp.eq.s32.totalorder %s23, 0
      %p85 = por %p83, %p84
      %p86 = scmp.ne.s32.totalorder %s78, %s80
      %p87 = scmp.eq.s32.totalorder %s28, 1
      %p88 = por %p86, %p87
      %p89 = scmp.ne.s32.totalorder %s80, %s81
      %p90 = scmp.eq.s32.totalorder %s28, 0
      %p91 = por %p89, %p90
      %p92 = scmp.ne.s32.totalorder %s80, %s81
      %p93 = scmp.eq.s32.totalorder %s29, 1
      %p94 = por %p92, %p93
      %p96 = scmp.ne.s32.totalorder %s81, %s95
      %p97 = scmp.eq.s32.totalorder %s29, 0
      %p98 = por %p96, %p97
      %s100 = sadd.s32 %s99, 1
      %p103 = scmp.eq.s32.totalorder %s23, 1
      %p104 = scmp.ne.s32.totalorder %s99, %s101
      %p105 = scmp.eq.s32.totalorder %s23, 0
      %p106 = por %p104, %p105
      %p107 = scmp.ne.s32.totalorder %s99, %s101
      %p108 = scmp.eq.s32.totalorder %s28, 1
      %p109 = por %p107, %p108
      %p110 = scmp.ne.s32.totalorder %s101, %s102
      %p111 = scmp.eq.s32.totalorder %s28, 0
      %p112 = por %p110, %p111
      %p113 = scmp.ne.s32.totalorder %s101, %s102
      %p114 = scmp.eq.s32.totalorder %s29, 1
      %p115 = por %p113, %p114
      %p117 = scmp.ne.s32.totalorder %s102, %s116
      %p118 = scmp.eq.s32.totalorder %s29, 0
      %p119 = por %p117, %p118
      %s121 = sadd.s32 %s120, 1
      %p124 = scmp.eq.s32.totalorder %s23, 1
      %p125 = scmp.ne.s32.totalorder %s120, %s122
      %p126 = scmp.eq.s32.totalorder %s23, 0
      %p127 = por %p125, %p126
      %p128 = scmp.ne.s32.totalorder %s120, %s122
      %p129 = scmp.eq.s32.totalorder %s28, 1
      %p130 = por %p128, %p129
      %p131 = scmp.ne.s32.totalorder %s122, %s123
      %p132 = scmp.eq.s32.totalorder %s28, 0
      %p133 = por %p131, %p132
      %p134 = scmp.ne.s32.totalorder %s122, %s123
      %p135 = scmp.eq.s32.totalorder %s29, 1
      %p136 = por %p134, %p135
      %p138 = scmp.ne.s32.totalorder %s123, %s137
      %p139 = scmp.eq.s32.totalorder %s29, 0
      %p140 = por %p138, %p139
      %s142 = sadd.s32 %s141, 1
      %p145 = scmp.eq.s32.totalorder %s23, 1
      %p146 = scmp.ne.s32.totalorder %s141, %s143
      %p147 = scmp.eq.s32.totalorder %s23, 0
      %p148 = por %p146, %p147
      %p149 = scmp.ne.s32.totalorder %s141, %s143
      %p150 = scmp.eq.s32.totalorder %s28, 1
      %p151 = por %p149, %p150
      %p152 = scmp.ne.s32.totalorder %s143, %s144
      %p153 = scmp.eq.s32.totalorder %s28, 0
      %p154 = por %p152, %p153
      %p155 = scmp.ne.s32.totalorder %s143, %s144
      %p156 = scmp.eq.s32.totalorder %s29, 1
      %p157 = por %p155, %p156
      %p159 = scmp.ne.s32.totalorder %s144, %s158
      %p160 = scmp.eq.s32.totalorder %s29, 0
      %p161 = por %p159, %p160
      %s163 = sadd.s32 %s162, 1
      %p166 = scmp.eq.s32.totalorder %s23, 1
      %p167 = scmp.ne.s32.totalorder %s162, %s164
      %p168 = scmp.eq.s32.totalorder %s23, 0
      %p169 = por %p167, %p168
      %p170 = scmp.ne.s32.totalorder %s162, %s164
      %p171 = scmp.eq.s32.totalorder %s28, 1
      %p172 = por %p170, %p171
      %p173 = scmp.ne.s32.totalorder %s164, %s165
      %p174 = scmp.eq.s32.totalorder %s28, 0
      %p175 = por %p173, %p174
      %p176 = scmp.ne.s32.totalorder %s164, %s165
      %p177 = scmp.eq.s32.totalorder %s29, 1
      %p178 = por %p176, %p177
      %p180 = scmp.ne.s32.totalorder %s165, %s179
      %p181 = scmp.eq.s32.totalorder %s29, 0
      %p182 = por %p180, %p181
      %s184 = sadd.s32 %s183, 1
      %p187 = scmp.eq.s32.totalorder %s23, 1
      %p188 = scmp.ne.s32.totalorder %s183, %s185
      %p189 = scmp.eq.s32.totalorder %s23, 0
      %p190 = por %p188, %p189
      %p191 = scmp.ne.s32.totalorder %s183, %s185
      %p192 = scmp.eq.s32.totalorder %s28, 1
      %p193 = por %p191, %p192
      %p194 = scmp.ne.s32.totalorder %s185, %s186
      %p195 = scmp.eq.s32.totalorder %s28, 0
      %p196 = por %p194, %p195
      %p197 = scmp.ne.s32.totalorder %s185, %s186
      %p198 = scmp.eq.s32.totalorder %s29, 1
      %p199 = por %p197, %p198
      %p201 = scmp.ne.s32.totalorder %s186, %s200
      %p202 = scmp.eq.s32.totalorder %s29, 0
      %p203 = por %p201, %p202
      %s204 = ssub.s32 %s23, %s30
      %p205 = scmp.eq.s32.totalorder %s204, 0
      %s207 = sadd.s32 %s206, 1
      %s208 = scalar_select %p205, %s206, %s207
      %p211 = pneg %p205
      %p212 = scmp.eq.s32.totalorder %s23, 1
      %p213 = por %p211, %p212
      %p214 = scmp.ne.s32.totalorder %s206, %s209
      %p215 = scmp.eq.s32.totalorder %s23, 0
      %p216 = por %p214, %p215
      %p217 = scmp.ne.s32.totalorder %s206, %s209
      %p218 = scmp.eq.s32.totalorder %s28, 1
      %p219 = por %p217, %p218
      %p220 = scmp.ne.s32.totalorder %s209, %s210
      %p221 = scmp.eq.s32.totalorder %s28, 0
      %p222 = por %p220, %p221
      %p223 = scmp.ne.s32.totalorder %s209, %s210
      %p224 = scmp.eq.s32.totalorder %s29, 1
      %p225 = por %p223, %p224
      %p227 = scmp.ne.s32.totalorder %s210, %s226
      %p228 = scmp.eq.s32.totalorder %s29, 0
      %p229 = por %p227, %p228
      %p230 = scmp.le.s32.totalorder 1, %s23
      %p231 = scmp.lt.s32.totalorder %s23, 3
      %p232 = pnand %p230, %p231
      %p233 = pneg %p232
      // Predicated region
      $region9: #{tpu_custom_call.1} parent=5 // pred_check
        _
      $region10: #{tpu_custom_call.1} parent=5 // pred_check_branch
        %235 = sbr.rel (%p232) target = $region12
      $region11: #{tpu_custom_call.1} parent=5 // pred_region
        %s236 = ssub.s32 %s23, 1
        // Predicated region
        $region13: #{tpu_custom_call.1} parent=11 // pred_check
          %p237 = pneg %p44
        $region14: #{tpu_custom_call.1} parent=11 // pred_check_branch
          %239 = sbr.rel (%p237) target = $region16
        $region15: #{tpu_custom_call.1} parent=11 // pred_region
          %s241 = ssub.s32 16, 16
          %242 = vsyncadd [#allocation5], %s241
          %245 = dma.hbm_to_smem %s0, 16, [#allocation2], [#allocation5]
        $region16: #{tpu_custom_call.1} parent=11 // pred_fallthru
          _
        // Predicated region
        $region17: #{tpu_custom_call.1} parent=11 // pred_check
          %p246 = pneg %p91
        $region18: #{tpu_custom_call.1} parent=11 // pred_check_branch
          %248 = sbr.rel (%p246) target = $region20
        $region19: #{tpu_custom_call.1} parent=11 // pred_region
          %s250 = ssub.s32 64, 64
          %251 = vsyncadd [#allocation8], %s250
          %s253 = sshll.u32 [#allocation7], 4
          %s254 = int_to_ptr.vmem [resolvable:$true] %s253
          %256 = dma.hbm_to_vmem [thread:$0]  %s2, 64, %s254, [#allocation8]
        $region20: #{tpu_custom_call.1} parent=11 // pred_fallthru
          _
        // Predicated region
        $region21: #{tpu_custom_call.1} parent=11 // pred_check
          %p257 = pneg %p112
        $region22: #{tpu_custom_call.1} parent=11 // pred_check_branch
          %259 = sbr.rel (%p257) target = $region24
        $region23: #{tpu_custom_call.1} parent=11 // pred_region
          _
        $region24: #{tpu_custom_call.1} parent=11 // pred_fallthru
          _
        // Predicated region
        $region25: #{tpu_custom_call.1} parent=11 // pred_check
          %p260 = pneg %p133
        $region26: #{tpu_custom_call.1} parent=11 // pred_check_branch
          %262 = sbr.rel (%p260) target = $region28
        $region27: #{tpu_custom_call.1} parent=11 // pred_region
          %s264 = ssub.s32 1024, 1024
          %265 = vsyncadd [#allocation8], %s264
          %s266 = sshll.u32 [#allocation9], 4
          %s267 = int_to_ptr.vmem [resolvable:$true] %s266
          %272 = dma.hbm_to_vmem [thread:$0]  %s4, 1024, %s267, [#allocation8], 128, 128, 8
        $region28: #{tpu_custom_call.1} parent=11 // pred_fallthru
          _
        // Predicated region
        $region29: #{tpu_custom_call.1} parent=11 // pred_check
          %p273 = pneg %p154
        $region30: #{tpu_custom_call.1} parent=11 // pred_check_branch
          %275 = sbr.rel (%p273) target = $region32
        $region31: #{tpu_custom_call.1} parent=11 // pred_region
          _
        $region32: #{tpu_custom_call.1} parent=11 // pred_fallthru
          _
        // Predicated region
        $region33: #{tpu_custom_call.1} parent=11 // pred_check
          %p276 = pneg %p175
        $region34: #{tpu_custom_call.1} parent=11 // pred_check_branch
          %278 = sbr.rel (%p276) target = $region36
        $region35: #{tpu_custom_call.1} parent=11 // pred_region
          %s280 = ssub.s32 1024, 1024
          %281 = vsyncadd [#allocation11], %s280
          %s282 = sshll.u32 [#allocation10], 4
          %s283 = int_to_ptr.vmem [resolvable:$true] %s282
          %288 = dma.hbm_to_vmem [thread:$0]  %s6, 1024, %s283, [#allocation11], 128, 128, 8
        $region36: #{tpu_custom_call.1} parent=11 // pred_fallthru
          _
        // Predicated region
        $region37: #{tpu_custom_call.1} parent=11 // pred_check
          %p289 = pneg %p196
        $region38: #{tpu_custom_call.1} parent=11 // pred_check_branch
          %291 = sbr.rel (%p289) target = $region40
        $region39: #{tpu_custom_call.1} parent=11 // pred_region
          _
        $region40: #{tpu_custom_call.1} parent=11 // pred_fallthru
          _
      $region12: #{tpu_custom_call.1} parent=5 // pred_fallthru
        _
      %p292 = scmp.lt.s32.totalorder %s23, 2
      // Predicated region
      $region41: #{tpu_custom_call.1} parent=5 // pred_check
        %p293 = pneg %p292
      $region42: #{tpu_custom_call.1} parent=5 // pred_check_branch
        %295 = sbr.rel (%p293) target = $region44
      $region43: #{tpu_custom_call.1} parent=5 // pred_region
        // Predicated region
        $region45: #{tpu_custom_call.1} parent=43 // pred_check
          %p296 = pneg %p64
        $region46: #{tpu_custom_call.1} parent=43 // pred_check_branch
          %298 = sbr.rel (%p296) target = $region48
        $region47: #{tpu_custom_call.1} parent=43 // pred_region
          %s299 = sand.u32 %s54, 1
          %s300 = scalar_lea.sflag [#allocation3], %s299
          %s301 = sand.u32 %s54, 1
          %s302 = smul.addr %s301, 160
          %s303 = scalar_lea.vmem [#allocation6], %s302
          %s304 = smul.u32 8, %s23
          %s306 = ssub.s32 2560, 2560
          %307 = vsyncadd %s300, %s306
          %s308 = smul.addr %s304, 64
          %s309 = scalar_lea.hbm %s1, %s308
          %s310 = sshll.u32 %s303, 4
          %s311 = int_to_ptr.vmem [resolvable:$true] %s310
          %316 = dma.hbm_to_vmem [thread:$0]  %s309, 2560, %s311, %s300, 1024, 512, 32
        $region48: #{tpu_custom_call.1} parent=43 // pred_fallthru
          _
      $region44: #{tpu_custom_call.1} parent=5 // pred_fallthru
        _
      %p317 = scmp.le.s32.totalorder 1, %s23
      %p318 = scmp.lt.s32.totalorder %s23, 3
      %p319 = pnand %p317, %p318
      %p320 = pneg %p319
      // Predicated region
      $region49: #{tpu_custom_call.1} parent=5 // pred_check
        _
      $region50: #{tpu_custom_call.1} parent=5 // pred_check_branch
        %322 = sbr.rel (%p319) target = $region52
      $region51: #{tpu_custom_call.1} parent=5 // pred_region
        %s323 = ssub.s32 %s23, 1
        // Predicated region
        $region53: #{tpu_custom_call.1} parent=51 // pred_check
          %p324 = pneg %p44
        $region54: #{tpu_custom_call.1} parent=51 // pred_check_branch
          %326 = sbr.rel (%p324) target = $region56
        $region55: #{tpu_custom_call.1} parent=51 // pred_region
          %327 = dma.done [#allocation5], 16
        $region56: #{tpu_custom_call.1} parent=51 // pred_fallthru
          _
        %s328 = sand.u32 %s57, 1
        %s329 = scalar_lea.sflag [#allocation3], %s328
        %s330 = sand.u32 %s57, 1
        %s331 = smul.addr %s330, 160
        %s332 = scalar_lea.vmem [#allocation6], %s331
        // Predicated region
        $region57: #{tpu_custom_call.1} parent=51 // pred_check
          %p333 = pneg %p70
        $region58: #{tpu_custom_call.1} parent=51 // pred_check_branch
          %335 = sbr.rel (%p333) target = $region60
        $region59: #{tpu_custom_call.1} parent=51 // pred_region
          %336 = dma.done %s329, 2560
        $region60: #{tpu_custom_call.1} parent=51 // pred_fallthru
          _
        // Predicated region
        $region61: #{tpu_custom_call.1} parent=51 // pred_check
          %p337 = pneg %p91
        $region62: #{tpu_custom_call.1} parent=51 // pred_check_branch
          %339 = sbr.rel (%p337) target = $region64
        $region63: #{tpu_custom_call.1} parent=51 // pred_region
          %340 = dma.done [#allocation8], 64
        $region64: #{tpu_custom_call.1} parent=51 // pred_fallthru
          _
        // Predicated region
        $region65: #{tpu_custom_call.1} parent=51 // pred_check
          %p341 = pneg %p133
        $region66: #{tpu_custom_call.1} parent=51 // pred_check_branch
          %343 = sbr.rel (%p341) target = $region68
        $region67: #{tpu_custom_call.1} parent=51 // pred_region
          %344 = dma.done [#allocation8], 1024
        $region68: #{tpu_custom_call.1} parent=51 // pred_fallthru
          _
        // Predicated region
        $region69: #{tpu_custom_call.1} parent=51 // pred_check
          %p345 = pneg %p175
        $region70: #{tpu_custom_call.1} parent=51 // pred_check_branch
          %347 = sbr.rel (%p345) target = $region72
        $region71: #{tpu_custom_call.1} parent=51 // pred_region
          %348 = dma.done [#allocation11], 1024
        $region72: #{tpu_custom_call.1} parent=51 // pred_fallthru
          _
        %349 = sfence
        %p350 = pneg %p44
        %p351 = pneg %p41
        %s352 = sand.u32 %s57, 1
        %s353 = scalar_lea.sflag [#allocation3], %s352
        %s354 = sand.u32 %s57, 1
        %s355 = smul.addr %s354, 160
        %s356 = scalar_lea.vmem [#allocation6], %s355
        %p357 = pneg %p70
        %p358 = pneg %p67
        %p359 = pneg %p91
        %p360 = pneg %p88
        %p361 = pneg %p112
        %p362 = pneg %p109
        %p363 = pneg %p133
        %p364 = pneg %p130
        %p365 = pneg %p154
        %p366 = pneg %p151
        %p367 = pneg %p175
        %p368 = pneg %p172
        %p369 = pneg %p196
        %p370 = pneg %p193
        %p371 = pneg %p222
        %p372 = pneg %p219
        %s373 = sand.u32 %s209, 1
        %s374 = scalar_lea.sflag [#allocation4], %s373
        %s375 = sand.u32 %s209, 1
        %s376 = smul.addr %s375, 64
        %s377 = scalar_lea.vmem [#allocation12], %s376
        %s378 = smul.u32 8, %s28
        %s379 = smul.u32 8, %s28
        %v381 = vld [vmem:[#allocation7] sm:$0xf]
        %v382 = vld [vmem:[%s332] sm:$0xff]
        %v383 = vld [vmem:[%s332 + $0x8] sm:$0xff]
        %v384 = vld [vmem:[%s332 + $0x10] sm:$0xff]
        %v385 = vld [vmem:[%s332 + $0x18] sm:$0xff]
        %v386 = vld [vmem:[%s332 + $0x20] sm:$0xff]
        %v387 = vld [vmem:[%s332 + $0x28] sm:$0xff]
        %v388 = vld [vmem:[%s332 + $0x30] sm:$0xff]
        %v389 = vld [vmem:[%s332 + $0x38] sm:$0xff]
        %v390 = vld [vmem:[%s332 + $0x40] sm:$0xff]
        %v391 = vld [vmem:[%s332 + $0x48] sm:$0xff]
        %v392 = vld [vmem:[%s332 + $0x50] sm:$0xff]
        %v393 = vld [vmem:[%s332 + $0x58] sm:$0xff]
        %v394 = vld [vmem:[%s332 + $0x60] sm:$0xff]
        %v395 = vld [vmem:[%s332 + $0x68] sm:$0xff]
        %v396 = vld [vmem:[%s332 + $0x70] sm:$0xff]
        %v397 = vld [vmem:[%s332 + $0x78] sm:$0xff]
        %v398 = vld [vmem:[%s332 + $0x80] sm:$0x33]
        %v399 = vld [vmem:[%s332 + $0x88] sm:$0x33]
        %v400 = vld [vmem:[%s332 + $0x90] sm:$0x33]
        %v401 = vld [vmem:[%s332 + $0x98] sm:$0x33]
        %v402 = vld [vmem:[%s3] sm:$0xff]
        %404 = vset.pattern.permute.xlu0 0
        %405 = vperm.xlu0 %404, %v402
        %v406 = vpop.permute.xlu0 %405
        %v428 = vunpack.c.l.b16 %v382
        %v429 = vunpack.c.h.b16 %v382
        %v430 = vunpack.c.l.b16 %v383
        %v431 = vunpack.c.h.b16 %v383
        %v432 = vunpack.c.l.b16 %v384
        %v433 = vunpack.c.h.b16 %v384
        %v434 = vunpack.c.l.b16 %v385
        %v435 = vunpack.c.h.b16 %v385
        %v436 = vunpack.c.l.b16 %v386
        %v437 = vunpack.c.h.b16 %v386
        %v438 = vunpack.c.l.b16 %v387
        %v439 = vunpack.c.h.b16 %v387
        %v440 = vunpack.c.l.b16 %v388
        %v441 = vunpack.c.h.b16 %v388
        %v442 = vunpack.c.l.b16 %v389
        %v443 = vunpack.c.h.b16 %v389
        %v444 = vunpack.c.l.b16 %v390
        %v445 = vunpack.c.h.b16 %v390
        %v446 = vunpack.c.l.b16 %v391
        %v447 = vunpack.c.h.b16 %v391
        %v448 = vunpack.c.l.b16 %v392
        %v449 = vunpack.c.h.b16 %v392
        %v450 = vunpack.c.l.b16 %v393
        %v451 = vunpack.c.h.b16 %v393
        %v452 = vunpack.c.l.b16 %v394
        %v453 = vunpack.c.h.b16 %v394
        %v454 = vunpack.c.l.b16 %v395
        %v455 = vunpack.c.h.b16 %v395
        %v456 = vunpack.c.l.b16 %v396
        %v457 = vunpack.c.h.b16 %v396
        %v458 = vunpack.c.l.b16 %v397
        %v459 = vunpack.c.h.b16 %v397
        %v460 = vunpack.c.l.b16 %v398
        %v461 = vunpack.c.h.b16 %v398
        %v462 = vunpack.c.l.b16 %v399
        %v463 = vunpack.c.h.b16 %v399
        %v464 = vunpack.c.l.b16 %v400
        %v465 = vunpack.c.h.b16 %v400
        %v466 = vunpack.c.l.b16 %v401
        %v467 = vunpack.c.h.b16 %v401
        %v468 = vpack.c.b16 %v436, %v428
        %v469 = vpack.c.b16 %v437, %v429
        %v470 = vpack.c.b16 %v438, %v430
        %v471 = vpack.c.b16 %v439, %v431
        %v472 = vpack.c.b16 %v440, %v432
        %v473 = vpack.c.b16 %v441, %v433
        %v474 = vpack.c.b16 %v442, %v434
        %v475 = vpack.c.b16 %v443, %v435
        %v476 = vpack.c.b16 %v452, %v444
        %v477 = vpack.c.b16 %v453, %v445
        %v478 = vpack.c.b16 %v454, %v446
        %v479 = vpack.c.b16 %v455, %v447
        %v480 = vpack.c.b16 %v456, %v448
        %v481 = vpack.c.b16 %v457, %v449
        %v482 = vpack.c.b16 %v458, %v450
        %v483 = vpack.c.b16 %v459, %v451
        %v484 = vpack.c.b16 %v460, %v460
        %v485 = vpack.c.b16 %v461, %v461
        %v486 = vpack.c.b16 %v462, %v462
        %v487 = vpack.c.b16 %v463, %v463
        %v488 = vpack.c.b16 %v464, %v464
        %v489 = vpack.c.b16 %v465, %v465
        %v490 = vpack.c.b16 %v466, %v466
        %v491 = vpack.c.b16 %v467, %v467
        %vm508 = vcmask 293888
        %v510 = vsel %vm508, %v381, 0
        %vm512 = vcmask 1041408
        %v514 = vsel %vm512, %v484, 0
        %v517 = vsel %vm512, %v485, 0
        %v520 = vsel %vm512, %v486, 0
        %v523 = vsel %vm512, %v487, 0
        %v526 = vsel %vm512, %v488, 0
        %v529 = vsel %vm512, %v489, 0
        %v532 = vsel %vm512, %v490, 0
        %v535 = vsel %vm512, %v491, 0
        %537 = vmatprep.subr.bf16.mxu0 %v469
        %538 = vmatpush1.bf16.msra.mxu0 %v468
        %539 = vmatprep.subr.bf16.mxu0 %v477
        %540 = vmatpush1.bf16.msra.mxu0 %v476
        %541 = vmatprep.subr.bf16.mxu0 %v517
        %542 = vmatpush1.bf16.msra.mxu0 %v514
        %543 = vmatprep.subr.bf16.mxu0 0
        %544 = vmatpush1.bf16.msra.mxu0 0
        %545 = vmatprep.subr.bf16.mxu0 0
        %546 = vmatpush1.bf16.msra.mxu0 0
        %547 = vmatprep.subr.bf16.mxu0 0
        %548 = vmatpush1.bf16.msra.mxu0 0
        %549 = vmatprep.subr.bf16.mxu0 0
        %550 = vmatpush1.bf16.msra.mxu0 0
        %551 = vmatprep.subr.bf16.mxu0 0
        %552 = vmatpush1.bf16.msra.mxu0 0
        %553 = vmatprep.subr.bf16.mxu0 0
        %554 = vmatpush1.bf16.msra.mxu0 0
        %555 = vmatprep.subr.bf16.mxu0 0
        %556 = vmatpush1.bf16.msra.mxu0 0
        %557 = vmatprep.subr.bf16.mxu0 0
        %558 = vmatpush1.bf16.msra.mxu0 0
        %559 = vmatprep.subr.bf16.mxu0 0
        %560 = vmatpush1.bf16.msra.mxu0 0
        %561 = vmatprep.subr.bf16.mxu0 0
        %562 = vmatpush1.bf16.msra.mxu0 0
        %563 = vmatprep.subr.bf16.mxu0 0
        %564 = vmatpush1.bf16.msra.mxu0 0
        %565 = vmatprep.subr.bf16.mxu0 0
        %566 = vmatpush1.bf16.msra.mxu0 0
        %567 = vmatprep.subr.bf16.mxu0 0
        %568 = vmatpush1.bf16.msra.mxu0 0
        %569 = vmatprep.mubr.bf16.mxu0 0
        %570 = vmatmul.mubr.bf16.gmra.mrb[0].mxu0 %v510
        %v571 = vpop.f32.mrb[0].mxu0
        %v572 = vadd.f32 %v406, %v571
        %v573 = vpop.f32.mrb[0].mxu0
        %v574 = vadd.f32 %v406, %v573
        %v575 = vpop.f32.mrb[0].mxu0
        %v576 = vpop.f32.mrb[0].mxu0
        %577 = vdwg.mxu0
        %578 = vmatprep.subr.bf16.mxu0 %v471
        %579 = vmatpush1.bf16.msra.mxu0 %v470
        %580 = vmatprep.subr.bf16.mxu0 %v479
        %581 = vmatpush1.bf16.msra.mxu0 %v478
        %582 = vmatprep.subr.bf16.mxu0 %v523
        %583 = vmatpush1.bf16.msra.mxu0 %v520
        %584 = vmatprep.subr.bf16.mxu0 0
        %585 = vmatpush1.bf16.msra.mxu0 0
        %586 = vmatprep.subr.bf16.mxu0 0
        %587 = vmatpush1.bf16.msra.mxu0 0
        %588 = vmatprep.subr.bf16.mxu0 0
        %589 = vmatpush1.bf16.msra.mxu0 0
        %590 = vmatprep.subr.bf16.mxu0 0
        %591 = vmatpush1.bf16.msra.mxu0 0
        %592 = vmatprep.subr.bf16.mxu0 0
        %593 = vmatpush1.bf16.msra.mxu0 0
        %594 = vmatprep.subr.bf16.mxu0 0
        %595 = vmatpush1.bf16.msra.mxu0 0
        %596 = vmatprep.subr.bf16.mxu0 0
        %597 = vmatpush1.bf16.msra.mxu0 0
        %598 = vmatprep.subr.bf16.mxu0 0
        %599 = vmatpush1.bf16.msra.mxu0 0
        %600 = vmatprep.subr.bf16.mxu0 0
        %601 = vmatpush1.bf16.msra.mxu0 0
        %602 = vmatprep.subr.bf16.mxu0 0
        %603 = vmatpush1.bf16.msra.mxu0 0
        %604 = vmatprep.subr.bf16.mxu0 0
        %605 = vmatpush1.bf16.msra.mxu0 0
        %606 = vmatprep.subr.bf16.mxu0 0
        %607 = vmatpush1.bf16.msra.mxu0 0
        %608 = vmatprep.subr.bf16.mxu0 0
        %609 = vmatpush1.bf16.msra.mxu0 0
        %610 = vmatprep.mubr.bf16.mxu0 0
        %611 = vmatmul.mubr.bf16.gmra.mrb[0].mxu0 %v510
        %v612 = vpop.f32.mrb[0].mxu0
        %v613 = vadd.f32 %v406, %v612
        %v614 = vpop.f32.mrb[0].mxu0
        %v615 = vadd.f32 %v406, %v614
        %v616 = vpop.f32.mrb[0].mxu0
        %v617 = vpop.f32.mrb[0].mxu0
        %618 = vdwg.mxu0
        %619 = vmatprep.subr.bf16.mxu0 %v473
        %620 = vmatpush1.bf16.msra.mxu0 %v472
        %621 = vmatprep.subr.bf16.mxu0 %v481
        %622 = vmatpush1.bf16.msra.mxu0 %v480
        %623 = vmatprep.subr.bf16.mxu0 %v529
        %624 = vmatpush1.bf16.msra.mxu0 %v526
        %625 = vmatprep.subr.bf16.mxu0 0
        %626 = vmatpush1.bf16.msra.mxu0 0
        %627 = vmatprep.subr.bf16.mxu0 0
        %628 = vmatpush1.bf16.msra.mxu0 0
        %629 = vmatprep.subr.bf16.mxu0 0
        %630 = vmatpush1.bf16.msra.mxu0 0
        %631 = vmatprep.subr.bf16.mxu0 0
        %632 = vmatpush1.bf16.msra.mxu0 0
        %633 = vmatprep.subr.bf16.mxu0 0
        %634 = vmatpush1.bf16.msra.mxu0 0
        %635 = vmatprep.subr.bf16.mxu0 0
        %636 = vmatpush1.bf16.msra.mxu0 0
        %637 = vmatprep.subr.bf16.mxu0 0
        %638 = vmatpush1.bf16.msra.mxu0 0
        %639 = vmatprep.subr.bf16.mxu0 0
        %640 = vmatpush1.bf16.msra.mxu0 0
        %641 = vmatprep.subr.bf16.mxu0 0
        %642 = vmatpush1.bf16.msra.mxu0 0
        %643 = vmatprep.subr.bf16.mxu0 0
        %644 = vmatpush1.bf16.msra.mxu0 0
        %645 = vmatprep.subr.bf16.mxu0 0
        %646 = vmatpush1.bf16.msra.mxu0 0
        %647 = vmatprep.subr.bf16.mxu0 0
        %648 = vmatpush1.bf16.msra.mxu0 0
        %649 = vmatprep.subr.bf16.mxu0 0
        %650 = vmatpush1.bf16.msra.mxu0 0
        %651 = vmatprep.mubr.bf16.mxu0 0
        %652 = vmatmul.mubr.bf16.gmra.mrb[0].mxu0 %v510
        %v653 = vpop.f32.mrb[0].mxu0
        %v654 = vadd.f32 %v406, %v653
        %v655 = vpop.f32.mrb[0].mxu0
        %v656 = vadd.f32 %v406, %v655
        %v657 = vpop.f32.mrb[0].mxu0
        %v658 = vpop.f32.mrb[0].mxu0
        %659 = vdwg.mxu0
        %660 = vmatprep.subr.bf16.mxu0 %v475
        %661 = vmatpush1.bf16.msra.mxu0 %v474
        %662 = vmatprep.subr.bf16.mxu0 %v483
        %663 = vmatpush1.bf16.msra.mxu0 %v482
        %664 = vmatprep.subr.bf16.mxu0 %v535
        %665 = vmatpush1.bf16.msra.mxu0 %v532
        %666 = vmatprep.subr.bf16.mxu0 0
        %667 = vmatpush1.bf16.msra.mxu0 0
        %668 = vmatprep.subr.bf16.mxu0 0
        %669 = vmatpush1.bf16.msra.mxu0 0
        %670 = vmatprep.subr.bf16.mxu0 0
        %671 = vmatpush1.bf16.msra.mxu0 0
        %672 = vmatprep.subr.bf16.mxu0 0
        %673 = vmatpush1.bf16.msra.mxu0 0
        %674 = vmatprep.subr.bf16.mxu0 0
        %675 = vmatpush1.bf16.msra.mxu0 0
        %676 = vmatprep.subr.bf16.mxu0 0
        %677 = vmatpush1.bf16.msra.mxu0 0
        %678 = vmatprep.subr.bf16.mxu0 0
        %679 = vmatpush1.bf16.msra.mxu0 0
        %680 = vmatprep.subr.bf16.mxu0 0
        %681 = vmatpush1.bf16.msra.mxu0 0
        %682 = vmatprep.subr.bf16.mxu0 0
        %683 = vmatpush1.bf16.msra.mxu0 0
        %684 = vmatprep.subr.bf16.mxu0 0
        %685 = vmatpush1.bf16.msra.mxu0 0
        %686 = vmatprep.subr.bf16.mxu0 0
        %687 = vmatpush1.bf16.msra.mxu0 0
        %688 = vmatprep.subr.bf16.mxu0 0
        %689 = vmatpush1.bf16.msra.mxu0 0
        %690 = vmatprep.subr.bf16.mxu0 0
        %691 = vmatpush1.bf16.msra.mxu0 0
        %692 = vmatprep.mubr.bf16.mxu0 0
        %693 = vmatmul.mubr.bf16.gmra.mrb[0].mxu0 %v510
        %v694 = vpop.f32.mrb[0].mxu0
        %v695 = vadd.f32 %v406, %v694
        %v696 = vpop.f32.mrb[0].mxu0
        %v697 = vadd.f32 %v406, %v696
        %v698 = vpop.f32.mrb[0].mxu0
        %v699 = vpop.f32.mrb[0].mxu0
        %700 = vdwg.mxu0
        %v701 = vld [vmem:[%s5] sm:$0xff]
        %v702 = vunpack.c.l.bf16 %v701
        %v703 = vunpack.c.h.bf16 %v701
        %v704 = vld [vmem:[%s7] sm:$0xff]
        %v705 = vunpack.c.l.bf16 %v704
        %v706 = vunpack.c.h.bf16 %v704
        %s707 = smul.u32 %s28, 32
        %s708 = sld [smem:[#allocation2 + %s707]]
        %v709 = vld [vmem:[#allocation9] sm:$0xff]
        %v710 = vunpack.c.l.bf16 %v709
        %v711 = vunpack.c.h.bf16 %v709
        %v712 = vstv %s708
        %v713 = vmul.f32 %v712, %v710
        %v714 = vmul.f32 %v712, %v711
        %v715 = vadd.f32 %v702, %v713
        %v716 = vadd.f32 %v703, %v714
        %v717 = vld [vmem:[#allocation10] sm:$0xff]
        %v718 = vunpack.c.l.bf16 %v717
        %v719 = vunpack.c.h.bf16 %v717
        %v720 = vmul.f32 %v712, %v718
        %v721 = vmul.f32 %v712, %v719
        %v722 = vadd.f32 %v705, %v720
        %v723 = vadd.f32 %v706, %v721
        %s724 = sadd.s32 %s707, 1
        %s725 = sld [smem:[#allocation2 + %s724]]
        %s726 = scalar_lea.vmem [#allocation9], 8
        %v727 = vld [vmem:[%s726] sm:$0xff]
        %v728 = vunpack.c.l.bf16 %v727
        %v729 = vunpack.c.h.bf16 %v727
        %v730 = vstv %s725
        %v731 = vmul.f32 %v730, %v728
        %v732 = vmul.f32 %v730, %v729
        %v733 = vadd.f32 %v715, %v731
        %v734 = vadd.f32 %v716, %v732
        %s735 = scalar_lea.vmem [#allocation10], 8
        %v736 = vld [vmem:[%s735] sm:$0xff]
        %v737 = vunpack.c.l.bf16 %v736
        %v738 = vunpack.c.h.bf16 %v736
        %v739 = vmul.f32 %v730, %v737
        %v740 = vmul.f32 %v730, %v738
        %v741 = vadd.f32 %v722, %v739
        %v742 = vadd.f32 %v723, %v740
        %s743 = sadd.s32 %s707, 2
        %s744 = sld [smem:[#allocation2 + %s743]]
        %s745 = scalar_lea.vmem [#allocation9], 16
        %v746 = vld [vmem:[%s745] sm:$0xff]
        %v747 = vunpack.c.l.bf16 %v746
        %v748 = vunpack.c.h.bf16 %v746
        %v749 = vstv %s744
        %v750 = vmul.f32 %v749, %v747
        %v751 = vmul.f32 %v749, %v748
        %v752 = vadd.f32 %v733, %v750
        %v753 = vadd.f32 %v734, %v751
        %s754 = scalar_lea.vmem [#allocation10], 16
        %v755 = vld [vmem:[%s754] sm:$0xff]
        %v756 = vunpack.c.l.bf16 %v755
        %v757 = vunpack.c.h.bf16 %v755
        %v758 = vmul.f32 %v749, %v756
        %v759 = vmul.f32 %v749, %v757
        %v760 = vadd.f32 %v741, %v758
        %v761 = vadd.f32 %v742, %v759
        %s762 = sadd.s32 %s707, 3
        %s763 = sld [smem:[#allocation2 + %s762]]
        %s764 = scalar_lea.vmem [#allocation9], 24
        %v765 = vld [vmem:[%s764] sm:$0xff]
        %v766 = vunpack.c.l.bf16 %v765
        %v767 = vunpack.c.h.bf16 %v765
        %v768 = vstv %s763
        %v769 = vmul.f32 %v768, %v766
        %v770 = vmul.f32 %v768, %v767
        %v771 = vadd.f32 %v752, %v769
        %v772 = vadd.f32 %v753, %v770
        %s773 = scalar_lea.vmem [#allocation10], 24
        %v774 = vld [vmem:[%s773] sm:$0xff]
        %v775 = vunpack.c.l.bf16 %v774
        %v776 = vunpack.c.h.bf16 %v774
        %v777 = vmul.f32 %v768, %v775
        %v778 = vmul.f32 %v768, %v776
        %v779 = vadd.f32 %v760, %v777
        %v780 = vadd.f32 %v761, %v778
        %s781 = sadd.s32 %s707, 4
        %s782 = sld [smem:[#allocation2 + %s781]]
        %s783 = scalar_lea.vmem [#allocation9], 32
        %v784 = vld [vmem:[%s783] sm:$0xff]
        %v785 = vunpack.c.l.bf16 %v784
        %v786 = vunpack.c.h.bf16 %v784
        %v787 = vstv %s782
        %v788 = vmul.f32 %v787, %v785
        %v789 = vmul.f32 %v787, %v786
        %v790 = vadd.f32 %v771, %v788
        %v791 = vadd.f32 %v772, %v789
        %s792 = scalar_lea.vmem [#allocation10], 32
        %v793 = vld [vmem:[%s792] sm:$0xff]
        %v794 = vunpack.c.l.bf16 %v793
        %v795 = vunpack.c.h.bf16 %v793
        %v796 = vmul.f32 %v787, %v794
        %v797 = vmul.f32 %v787, %v795
        %v798 = vadd.f32 %v779, %v796
        %v799 = vadd.f32 %v780, %v797
        %s800 = sadd.s32 %s707, 5
        %s801 = sld [smem:[#allocation2 + %s800]]
        %s802 = scalar_lea.vmem [#allocation9], 40
        %v803 = vld [vmem:[%s802] sm:$0xff]
        %v804 = vunpack.c.l.bf16 %v803
        %v805 = vunpack.c.h.bf16 %v803
        %v806 = vstv %s801
        %v807 = vmul.f32 %v806, %v804
        %v808 = vmul.f32 %v806, %v805
        %v809 = vadd.f32 %v790, %v807
        %v810 = vadd.f32 %v791, %v808
        %s811 = scalar_lea.vmem [#allocation10], 40
        %v812 = vld [vmem:[%s811] sm:$0xff]
        %v813 = vunpack.c.l.bf16 %v812
        %v814 = vunpack.c.h.bf16 %v812
        %v815 = vmul.f32 %v806, %v813
        %v816 = vmul.f32 %v806, %v814
        %v817 = vadd.f32 %v798, %v815
        %v818 = vadd.f32 %v799, %v816
        %s819 = sadd.s32 %s707, 6
        %s820 = sld [smem:[#allocation2 + %s819]]
        %s821 = scalar_lea.vmem [#allocation9], 48
        %v822 = vld [vmem:[%s821] sm:$0xff]
        %v823 = vunpack.c.l.bf16 %v822
        %v824 = vunpack.c.h.bf16 %v822
        %v825 = vstv %s820
        %v826 = vmul.f32 %v825, %v823
        %v827 = vmul.f32 %v825, %v824
        %v828 = vadd.f32 %v809, %v826
        %v829 = vadd.f32 %v810, %v827
        %s830 = scalar_lea.vmem [#allocation10], 48
        %v831 = vld [vmem:[%s830] sm:$0xff]
        %v832 = vunpack.c.l.bf16 %v831
        %v833 = vunpack.c.h.bf16 %v831
        %v834 = vmul.f32 %v825, %v832
        %v835 = vmul.f32 %v825, %v833
        %v836 = vadd.f32 %v817, %v834
        %v837 = vadd.f32 %v818, %v835
        %s838 = sadd.s32 %s707, 7
        %s839 = sld [smem:[#allocation2 + %s838]]
        %s840 = scalar_lea.vmem [#allocation9], 56
        %v841 = vld [vmem:[%s840] sm:$0xff]
        %v842 = vunpack.c.l.bf16 %v841
        %v843 = vunpack.c.h.bf16 %v841
        %v844 = vstv %s839
        %v845 = vmul.f32 %v844, %v842
        %v846 = vmul.f32 %v844, %v843
        %v847 = vadd.f32 %v828, %v845
        %v848 = vadd.f32 %v829, %v846
        %s849 = scalar_lea.vmem [#allocation10], 56
        %v850 = vld [vmem:[%s849] sm:$0xff]
        %v851 = vunpack.c.l.bf16 %v850
        %v852 = vunpack.c.h.bf16 %v850
        %v853 = vmul.f32 %v844, %v851
        %v854 = vmul.f32 %v844, %v852
        %v855 = vadd.f32 %v836, %v853
        %v856 = vadd.f32 %v837, %v854
        %vm857 = vcmp.gt.f32.partialorder %v572, %v847
        %vm858 = vcmp.gt.f32.partialorder %v574, %v848
        %v859 = vmul.f32 %v855, %v572
        %v860 = vmul.f32 %v856, %v574
        %v861 = vadd.f32 %v859, %v847
        %v862 = vadd.f32 %v860, %v848
        %v863 = vsel %vm857, %v572, %v861
        %v864 = vsel %vm858, %v574, %v862
        %865 = vst [vmem:[%s377] sm:$0xff] %v863
        %866 = vst [vmem:[%s377 + $0x8] sm:$0xff] %v864
        %s867 = smul.u32 %s28, 4
        %s868 = sadd.s32 %s867, 1
        %s869 = smul.u32 %s868, 8
        %s870 = sld [smem:[#allocation2 + %s869]]
        %v871 = vld [vmem:[#allocation9] sm:$0xff]
        %v872 = vunpack.c.l.bf16 %v871
        %v873 = vunpack.c.h.bf16 %v871
        %v874 = vstv %s870
        %v875 = vmul.f32 %v874, %v872
        %v876 = vmul.f32 %v874, %v873
        %v877 = vadd.f32 %v702, %v875
        %v878 = vadd.f32 %v703, %v876
        %v879 = vld [vmem:[#allocation10] sm:$0xff]
        %v880 = vunpack.c.l.bf16 %v879
        %v881 = vunpack.c.h.bf16 %v879
        %v882 = vmul.f32 %v874, %v880
        %v883 = vmul.f32 %v874, %v881
        %v884 = vadd.f32 %v705, %v882
        %v885 = vadd.f32 %v706, %v883
        %s886 = sadd.s32 %s869, 1
        %s887 = sld [smem:[#allocation2 + %s886]]
        %v888 = vld [vmem:[%s726] sm:$0xff]
        %v889 = vunpack.c.l.bf16 %v888
        %v890 = vunpack.c.h.bf16 %v888
        %v891 = vstv %s887
        %v892 = vmul.f32 %v891, %v889
        %v893 = vmul.f32 %v891, %v890
        %v894 = vadd.f32 %v877, %v892
        %v895 = vadd.f32 %v878, %v893
        %v896 = vld [vmem:[%s735] sm:$0xff]
        %v897 = vunpack.c.l.bf16 %v896
        %v898 = vunpack.c.h.bf16 %v896
        %v899 = vmul.f32 %v891, %v897
        %v900 = vmul.f32 %v891, %v898
        %v901 = vadd.f32 %v884, %v899
        %v902 = vadd.f32 %v885, %v900
        %s903 = sadd.s32 %s869, 2
        %s904 = sld [smem:[#allocation2 + %s903]]
        %v905 = vld [vmem:[%s745] sm:$0xff]
        %v906 = vunpack.c.l.bf16 %v905
        %v907 = vunpack.c.h.bf16 %v905
        %v908 = vstv %s904
        %v909 = vmul.f32 %v908, %v906
        %v910 = vmul.f32 %v908, %v907
        %v911 = vadd.f32 %v894, %v909
        %v912 = vadd.f32 %v895, %v910
        %v913 = vld [vmem:[%s754] sm:$0xff]
        %v914 = vunpack.c.l.bf16 %v913
        %v915 = vunpack.c.h.bf16 %v913
        %v916 = vmul.f32 %v908, %v914
        %v917 = vmul.f32 %v908, %v915
        %v918 = vadd.f32 %v901, %v916
        %v919 = vadd.f32 %v902, %v917
        %s920 = sadd.s32 %s869, 3
        %s921 = sld [smem:[#allocation2 + %s920]]
        %v922 = vld [vmem:[%s764] sm:$0xff]
        %v923 = vunpack.c.l.bf16 %v922
        %v924 = vunpack.c.h.bf16 %v922
        %v925 = vstv %s921
        %v926 = vmul.f32 %v925, %v923
        %v927 = vmul.f32 %v925, %v924
        %v928 = vadd.f32 %v911, %v926
        %v929 = vadd.f32 %v912, %v927
        %v930 = vld [vmem:[%s773] sm:$0xff]
        %v931 = vunpack.c.l.bf16 %v930
        %v932 = vunpack.c.h.bf16 %v930
        %v933 = vmul.f32 %v925, %v931
        %v934 = vmul.f32 %v925, %v932
        %v935 = vadd.f32 %v918, %v933
        %v936 = vadd.f32 %v919, %v934
        %s937 = sadd.s32 %s869, 4
        %s938 = sld [smem:[#allocation2 + %s937]]
        %v939 = vld [vmem:[%s783] sm:$0xff]
        %v940 = vunpack.c.l.bf16 %v939
        %v941 = vunpack.c.h.bf16 %v939
        %v942 = vstv %s938
        %v943 = vmul.f32 %v942, %v940
        %v944 = vmul.f32 %v942, %v941
        %v945 = vadd.f32 %v928, %v943
        %v946 = vadd.f32 %v929, %v944
        %v947 = vld [vmem:[%s792] sm:$0xff]
        %v948 = vunpack.c.l.bf16 %v947
        %v949 = vunpack.c.h.bf16 %v947
        %v950 = vmul.f32 %v942, %v948
        %v951 = vmul.f32 %v942, %v949
        %v952 = vadd.f32 %v935, %v950
        %v953 = vadd.f32 %v936, %v951
        %s954 = sadd.s32 %s869, 5
        %s955 = sld [smem:[#allocation2 + %s954]]
        %v956 = vld [vmem:[%s802] sm:$0xff]
        %v957 = vunpack.c.l.bf16 %v956
        %v958 = vunpack.c.h.bf16 %v956
        %v959 = vstv %s955
        %v960 = vmul.f32 %v959, %v957
        %v961 = vmul.f32 %v959, %v958
        %v962 = vadd.f32 %v945, %v960
        %v963 = vadd.f32 %v946, %v961
        %v964 = vld [vmem:[%s811] sm:$0xff]
        %v965 = vunpack.c.l.bf16 %v964
        %v966 = vunpack.c.h.bf16 %v964
        %v967 = vmul.f32 %v959, %v965
        %v968 = vmul.f32 %v959, %v966
        %v969 = vadd.f32 %v952, %v967
        %v970 = vadd.f32 %v953, %v968
        %s971 = sadd.s32 %s869, 6
        %s972 = sld [smem:[#allocation2 + %s971]]
        %v973 = vld [vmem:[%s821] sm:$0xff]
        %v974 = vunpack.c.l.bf16 %v973
        %v975 = vunpack.c.h.bf16 %v973
        %v976 = vstv %s972
        %v977 = vmul.f32 %v976, %v974
        %v978 = vmul.f32 %v976, %v975
        %v979 = vadd.f32 %v962, %v977
        %v980 = vadd.f32 %v963, %v978
        %v981 = vld [vmem:[%s830] sm:$0xff]
        %v982 = vunpack.c.l.bf16 %v981
        %v983 = vunpack.c.h.bf16 %v981
        %v984 = vmul.f32 %v976, %v982
        %v985 = vmul.f32 %v976, %v983
        %v986 = vadd.f32 %v969, %v984
        %v987 = vadd.f32 %v970, %v985
        %s988 = sadd.s32 %s869, 7
        %s989 = sld [smem:[#allocation2 + %s988]]
        %v990 = vld [vmem:[%s840] sm:$0xff]
        %v991 = vunpack.c.l.bf16 %v990
        %v992 = vunpack.c.h.bf16 %v990
        %v993 = vstv %s989
        %v994 = vmul.f32 %v993, %v991
        %v995 = vmul.f32 %v993, %v992
        %v996 = vadd.f32 %v979, %v994
        %v997 = vadd.f32 %v980, %v995
        %v998 = vld [vmem:[%s849] sm:$0xff]
        %v999 = vunpack.c.l.bf16 %v998
        %v1000 = vunpack.c.h.bf16 %v998
        %v1001 = vmul.f32 %v993, %v999
        %v1002 = vmul.f32 %v993, %v1000
        %v1003 = vadd.f32 %v986, %v1001
        %v1004 = vadd.f32 %v987, %v1002
        %vm1005 = vcmp.gt.f32.partialorder %v613, %v996
        %vm1006 = vcmp.gt.f32.partialorder %v615, %v997
        %v1007 = vmul.f32 %v1003, %v613
        %v1008 = vmul.f32 %v1004, %v615
        %v1009 = vadd.f32 %v1007, %v996
        %v1010 = vadd.f32 %v1008, %v997
        %v1011 = vsel %vm1005, %v613, %v1009
        %v1012 = vsel %vm1006, %v615, %v1010
        %1013 = vst [vmem:[%s377 + $0x10] sm:$0xff] %v1011
        %1014 = vst [vmem:[%s377 + $0x18] sm:$0xff] %v1012
        %s1015 = sadd.s32 %s867, 2
        %s1016 = smul.u32 %s1015, 8
        %s1017 = sld [smem:[#allocation2 + %s1016]]
        %v1018 = vld [vmem:[#allocation9] sm:$0xff]
        %v1019 = vunpack.c.l.bf16 %v1018
        %v1020 = vunpack.c.h.bf16 %v1018
        %v1021 = vstv %s1017
        %v1022 = vmul.f32 %v1021, %v1019
        %v1023 = vmul.f32 %v1021, %v1020
        %v1024 = vadd.f32 %v702, %v1022
        %v1025 = vadd.f32 %v703, %v1023
        %v1026 = vld [vmem:[#allocation10] sm:$0xff]
        %v1027 = vunpack.c.l.bf16 %v1026
        %v1028 = vunpack.c.h.bf16 %v1026
        %v1029 = vmul.f32 %v1021, %v1027
        %v1030 = vmul.f32 %v1021, %v1028
        %v1031 = vadd.f32 %v705, %v1029
        %v1032 = vadd.f32 %v706, %v1030
        %s1033 = sadd.s32 %s1016, 1
        %s1034 = sld [smem:[#allocation2 + %s1033]]
        %v1035 = vld [vmem:[%s726] sm:$0xff]
        %v1036 = vunpack.c.l.bf16 %v1035
        %v1037 = vunpack.c.h.bf16 %v1035
        %v1038 = vstv %s1034
        %v1039 = vmul.f32 %v1038, %v1036
        %v1040 = vmul.f32 %v1038, %v1037
        %v1041 = vadd.f32 %v1024, %v1039
        %v1042 = vadd.f32 %v1025, %v1040
        %v1043 = vld [vmem:[%s735] sm:$0xff]
        %v1044 = vunpack.c.l.bf16 %v1043
        %v1045 = vunpack.c.h.bf16 %v1043
        %v1046 = vmul.f32 %v1038, %v1044
        %v1047 = vmul.f32 %v1038, %v1045
        %v1048 = vadd.f32 %v1031, %v1046
        %v1049 = vadd.f32 %v1032, %v1047
        %s1050 = sadd.s32 %s1016, 2
        %s1051 = sld [smem:[#allocation2 + %s1050]]
        %v1052 = vld [vmem:[%s745] sm:$0xff]
        %v1053 = vunpack.c.l.bf16 %v1052
        %v1054 = vunpack.c.h.bf16 %v1052
        %v1055 = vstv %s1051
        %v1056 = vmul.f32 %v1055, %v1053
        %v1057 = vmul.f32 %v1055, %v1054
        %v1058 = vadd.f32 %v1041, %v1056
        %v1059 = vadd.f32 %v1042, %v1057
        %v1060 = vld [vmem:[%s754] sm:$0xff]
        %v1061 = vunpack.c.l.bf16 %v1060
        %v1062 = vunpack.c.h.bf16 %v1060
        %v1063 = vmul.f32 %v1055, %v1061
        %v1064 = vmul.f32 %v1055, %v1062
        %v1065 = vadd.f32 %v1048, %v1063
        %v1066 = vadd.f32 %v1049, %v1064
        %s1067 = sadd.s32 %s1016, 3
        %s1068 = sld [smem:[#allocation2 + %s1067]]
        %v1069 = vld [vmem:[%s764] sm:$0xff]
        %v1070 = vunpack.c.l.bf16 %v1069
        %v1071 = vunpack.c.h.bf16 %v1069
        %v1072 = vstv %s1068
        %v1073 = vmul.f32 %v1072, %v1070
        %v1074 = vmul.f32 %v1072, %v1071
        %v1075 = vadd.f32 %v1058, %v1073
        %v1076 = vadd.f32 %v1059, %v1074
        %v1077 = vld [vmem:[%s773] sm:$0xff]
        %v1078 = vunpack.c.l.bf16 %v1077
        %v1079 = vunpack.c.h.bf16 %v1077
        %v1080 = vmul.f32 %v1072, %v1078
        %v1081 = vmul.f32 %v1072, %v1079
        %v1082 = vadd.f32 %v1065, %v1080
        %v1083 = vadd.f32 %v1066, %v1081
        %s1084 = sadd.s32 %s1016, 4
        %s1085 = sld [smem:[#allocation2 + %s1084]]
        %v1086 = vld [vmem:[%s783] sm:$0xff]
        %v1087 = vunpack.c.l.bf16 %v1086
        %v1088 = vunpack.c.h.bf16 %v1086
        %v1089 = vstv %s1085
        %v1090 = vmul.f32 %v1089, %v1087
        %v1091 = vmul.f32 %v1089, %v1088
        %v1092 = vadd.f32 %v1075, %v1090
        %v1093 = vadd.f32 %v1076, %v1091
        %v1094 = vld [vmem:[%s792] sm:$0xff]
        %v1095 = vunpack.c.l.bf16 %v1094
        %v1096 = vunpack.c.h.bf16 %v1094
        %v1097 = vmul.f32 %v1089, %v1095
        %v1098 = vmul.f32 %v1089, %v1096
        %v1099 = vadd.f32 %v1082, %v1097
        %v1100 = vadd.f32 %v1083, %v1098
        %s1101 = sadd.s32 %s1016, 5
        %s1102 = sld [smem:[#allocation2 + %s1101]]
        %v1103 = vld [vmem:[%s802] sm:$0xff]
        %v1104 = vunpack.c.l.bf16 %v1103
        %v1105 = vunpack.c.h.bf16 %v1103
        %v1106 = vstv %s1102
        %v1107 = vmul.f32 %v1106, %v1104
        %v1108 = vmul.f32 %v1106, %v1105
        %v1109 = vadd.f32 %v1092, %v1107
        %v1110 = vadd.f32 %v1093, %v1108
        %v1111 = vld [vmem:[%s811] sm:$0xff]
        %v1112 = vunpack.c.l.bf16 %v1111
        %v1113 = vunpack.c.h.bf16 %v1111
        %v1114 = vmul.f32 %v1106, %v1112
        %v1115 = vmul.f32 %v1106, %v1113
        %v1116 = vadd.f32 %v1099, %v1114
        %v1117 = vadd.f32 %v1100, %v1115
        %s1118 = sadd.s32 %s1016, 6
        %s1119 = sld [smem:[#allocation2 + %s1118]]
        %v1120 = vld [vmem:[%s821] sm:$0xff]
        %v1121 = vunpack.c.l.bf16 %v1120
        %v1122 = vunpack.c.h.bf16 %v1120
        %v1123 = vstv %s1119
        %v1124 = vmul.f32 %v1123, %v1121
        %v1125 = vmul.f32 %v1123, %v1122
        %v1126 = vadd.f32 %v1109, %v1124
        %v1127 = vadd.f32 %v1110, %v1125
        %v1128 = vld [vmem:[%s830] sm:$0xff]
        %v1129 = vunpack.c.l.bf16 %v1128
        %v1130 = vunpack.c.h.bf16 %v1128
        %v1131 = vmul.f32 %v1123, %v1129
        %v1132 = vmul.f32 %v1123, %v1130
        %v1133 = vadd.f32 %v1116, %v1131
        %v1134 = vadd.f32 %v1117, %v1132
        %s1135 = sadd.s32 %s1016, 7
        %s1136 = sld [smem:[#allocation2 + %s1135]]
        %v1137 = vld [vmem:[%s840] sm:$0xff]
        %v1138 = vunpack.c.l.bf16 %v1137
        %v1139 = vunpack.c.h.bf16 %v1137
        %v1140 = vstv %s1136
        %v1141 = vmul.f32 %v1140, %v1138
        %v1142 = vmul.f32 %v1140, %v1139
        %v1143 = vadd.f32 %v1126, %v1141
        %v1144 = vadd.f32 %v1127, %v1142
        %v1145 = vld [vmem:[%s849] sm:$0xff]
        %v1146 = vunpack.c.l.bf16 %v1145
        %v1147 = vunpack.c.h.bf16 %v1145
        %v1148 = vmul.f32 %v1140, %v1146
        %v1149 = vmul.f32 %v1140, %v1147
        %v1150 = vadd.f32 %v1133, %v1148
        %v1151 = vadd.f32 %v1134, %v1149
        %vm1152 = vcmp.gt.f32.partialorder %v654, %v1143
        %vm1153 = vcmp.gt.f32.partialorder %v656, %v1144
        %v1154 = vmul.f32 %v1150, %v654
        %v1155 = vmul.f32 %v1151, %v656
        %v1156 = vadd.f32 %v1154, %v1143
        %v1157 = vadd.f32 %v1155, %v1144
        %v1158 = vsel %vm1152, %v654, %v1156
        %v1159 = vsel %vm1153, %v656, %v1157
        %1160 = vst [vmem:[%s377 + $0x20] sm:$0xff] %v1158
        %1161 = vst [vmem:[%s377 + $0x28] sm:$0xff] %v1159
        %s1162 = sadd.s32 %s867, 3
        %s1163 = smul.u32 %s1162, 8
        %s1164 = sld [smem:[#allocation2 + %s1163]]
        %v1165 = vld [vmem:[#allocation9] sm:$0xff]
        %v1166 = vunpack.c.l.bf16 %v1165
        %v1167 = vunpack.c.h.bf16 %v1165
        %v1168 = vstv %s1164
        %v1169 = vmul.f32 %v1168, %v1166
        %v1170 = vmul.f32 %v1168, %v1167
        %v1171 = vadd.f32 %v702, %v1169
        %v1172 = vadd.f32 %v703, %v1170
        %v1173 = vld [vmem:[#allocation10] sm:$0xff]
        %v1174 = vunpack.c.l.bf16 %v1173
        %v1175 = vunpack.c.h.bf16 %v1173
        %v1176 = vmul.f32 %v1168, %v1174
        %v1177 = vmul.f32 %v1168, %v1175
        %v1178 = vadd.f32 %v705, %v1176
        %v1179 = vadd.f32 %v706, %v1177
        %s1180 = sadd.s32 %s1163, 1
        %s1181 = sld [smem:[#allocation2 + %s1180]]
        %v1182 = vld [vmem:[%s726] sm:$0xff]
        %v1183 = vunpack.c.l.bf16 %v1182
        %v1184 = vunpack.c.h.bf16 %v1182
        %v1185 = vstv %s1181
        %v1186 = vmul.f32 %v1185, %v1183
        %v1187 = vmul.f32 %v1185, %v1184
        %v1188 = vadd.f32 %v1171, %v1186
        %v1189 = vadd.f32 %v1172, %v1187
        %v1190 = vld [vmem:[%s735] sm:$0xff]
        %v1191 = vunpack.c.l.bf16 %v1190
        %v1192 = vunpack.c.h.bf16 %v1190
        %v1193 = vmul.f32 %v1185, %v1191
        %v1194 = vmul.f32 %v1185, %v1192
        %v1195 = vadd.f32 %v1178, %v1193
        %v1196 = vadd.f32 %v1179, %v1194
        %s1197 = sadd.s32 %s1163, 2
        %s1198 = sld [smem:[#allocation2 + %s1197]]
        %v1199 = vld [vmem:[%s745] sm:$0xff]
        %v1200 = vunpack.c.l.bf16 %v1199
        %v1201 = vunpack.c.h.bf16 %v1199
        %v1202 = vstv %s1198
        %v1203 = vmul.f32 %v1202, %v1200
        %v1204 = vmul.f32 %v1202, %v1201
        %v1205 = vadd.f32 %v1188, %v1203
        %v1206 = vadd.f32 %v1189, %v1204
        %v1207 = vld [vmem:[%s754] sm:$0xff]
        %v1208 = vunpack.c.l.bf16 %v1207
        %v1209 = vunpack.c.h.bf16 %v1207
        %v1210 = vmul.f32 %v1202, %v1208
        %v1211 = vmul.f32 %v1202, %v1209
        %v1212 = vadd.f32 %v1195, %v1210
        %v1213 = vadd.f32 %v1196, %v1211
        %s1214 = sadd.s32 %s1163, 3
        %s1215 = sld [smem:[#allocation2 + %s1214]]
        %v1216 = vld [vmem:[%s764] sm:$0xff]
        %v1217 = vunpack.c.l.bf16 %v1216
        %v1218 = vunpack.c.h.bf16 %v1216
        %v1219 = vstv %s1215
        %v1220 = vmul.f32 %v1219, %v1217
        %v1221 = vmul.f32 %v1219, %v1218
        %v1222 = vadd.f32 %v1205, %v1220
        %v1223 = vadd.f32 %v1206, %v1221
        %v1224 = vld [vmem:[%s773] sm:$0xff]
        %v1225 = vunpack.c.l.bf16 %v1224
        %v1226 = vunpack.c.h.bf16 %v1224
        %v1227 = vmul.f32 %v1219, %v1225
        %v1228 = vmul.f32 %v1219, %v1226
        %v1229 = vadd.f32 %v1212, %v1227
        %v1230 = vadd.f32 %v1213, %v1228
        %s1231 = sadd.s32 %s1163, 4
        %s1232 = sld [smem:[#allocation2 + %s1231]]
        %v1233 = vld [vmem:[%s783] sm:$0xff]
        %v1234 = vunpack.c.l.bf16 %v1233
        %v1235 = vunpack.c.h.bf16 %v1233
        %v1236 = vstv %s1232
        %v1237 = vmul.f32 %v1236, %v1234
        %v1238 = vmul.f32 %v1236, %v1235
        %v1239 = vadd.f32 %v1222, %v1237
        %v1240 = vadd.f32 %v1223, %v1238
        %v1241 = vld [vmem:[%s792] sm:$0xff]
        %v1242 = vunpack.c.l.bf16 %v1241
        %v1243 = vunpack.c.h.bf16 %v1241
        %v1244 = vmul.f32 %v1236, %v1242
        %v1245 = vmul.f32 %v1236, %v1243
        %v1246 = vadd.f32 %v1229, %v1244
        %v1247 = vadd.f32 %v1230, %v1245
        %s1248 = sadd.s32 %s1163, 5
        %s1249 = sld [smem:[#allocation2 + %s1248]]
        %v1250 = vld [vmem:[%s802] sm:$0xff]
        %v1251 = vunpack.c.l.bf16 %v1250
        %v1252 = vunpack.c.h.bf16 %v1250
        %v1253 = vstv %s1249
        %v1254 = vmul.f32 %v1253, %v1251
        %v1255 = vmul.f32 %v1253, %v1252
        %v1256 = vadd.f32 %v1239, %v1254
        %v1257 = vadd.f32 %v1240, %v1255
        %v1258 = vld [vmem:[%s811] sm:$0xff]
        %v1259 = vunpack.c.l.bf16 %v1258
        %v1260 = vunpack.c.h.bf16 %v1258
        %v1261 = vmul.f32 %v1253, %v1259
        %v1262 = vmul.f32 %v1253, %v1260
        %v1263 = vadd.f32 %v1246, %v1261
        %v1264 = vadd.f32 %v1247, %v1262
        %s1265 = sadd.s32 %s1163, 6
        %s1266 = sld [smem:[#allocation2 + %s1265]]
        %v1267 = vld [vmem:[%s821] sm:$0xff]
        %v1268 = vunpack.c.l.bf16 %v1267
        %v1269 = vunpack.c.h.bf16 %v1267
        %v1270 = vstv %s1266
        %v1271 = vmul.f32 %v1270, %v1268
        %v1272 = vmul.f32 %v1270, %v1269
        %v1273 = vadd.f32 %v1256, %v1271
        %v1274 = vadd.f32 %v1257, %v1272
        %v1275 = vld [vmem:[%s830] sm:$0xff]
        %v1276 = vunpack.c.l.bf16 %v1275
        %v1277 = vunpack.c.h.bf16 %v1275
        %v1278 = vmul.f32 %v1270, %v1276
        %v1279 = vmul.f32 %v1270, %v1277
        %v1280 = vadd.f32 %v1263, %v1278
        %v1281 = vadd.f32 %v1264, %v1279
        %s1282 = sadd.s32 %s1163, 7
        %s1283 = sld [smem:[#allocation2 + %s1282]]
        %v1284 = vld [vmem:[%s840] sm:$0xff]
        %v1285 = vunpack.c.l.bf16 %v1284
        %v1286 = vunpack.c.h.bf16 %v1284
        %v1287 = vstv %s1283
        %v1288 = vmul.f32 %v1287, %v1285
        %v1289 = vmul.f32 %v1287, %v1286
        %v1290 = vadd.f32 %v1273, %v1288
        %v1291 = vadd.f32 %v1274, %v1289
        %v1292 = vld [vmem:[%s849] sm:$0xff]
        %v1293 = vunpack.c.l.bf16 %v1292
        %v1294 = vunpack.c.h.bf16 %v1292
        %v1295 = vmul.f32 %v1287, %v1293
        %v1296 = vmul.f32 %v1287, %v1294
        %v1297 = vadd.f32 %v1280, %v1295
        %v1298 = vadd.f32 %v1281, %v1296
        %vm1299 = vcmp.gt.f32.partialorder %v695, %v1290
        %vm1300 = vcmp.gt.f32.partialorder %v697, %v1291
        %v1301 = vmul.f32 %v1297, %v695
        %v1302 = vmul.f32 %v1298, %v697
        %v1303 = vadd.f32 %v1301, %v1290
        %v1304 = vadd.f32 %v1302, %v1291
        %v1305 = vsel %vm1299, %v695, %v1303
        %v1306 = vsel %vm1300, %v697, %v1304
        %1307 = vst [vmem:[%s377 + $0x30] sm:$0xff] %v1305
        %1308 = vst [vmem:[%s377 + $0x38] sm:$0xff] %v1306
        %s1309 = sand.u32 %s209, 1
        %s1310 = scalar_lea.sflag [#allocation4], %s1309
        %s1311 = sand.u32 %s209, 1
        %s1312 = smul.addr %s1311, 64
        %s1313 = scalar_lea.vmem [#allocation12], %s1312
        // Predicated region
        $region73: #{tpu_custom_call.1} parent=51 // pred_check
          %p1314 = pneg %p219
        $region74: #{tpu_custom_call.1} parent=51 // pred_check_branch
          %1316 = sbr.rel (%p1314) target = $region76
        $region75: #{tpu_custom_call.1} parent=51 // pred_region
          %s1317 = smul.u32 8, %s28
          %s1319 = ssub.s32 1024, 1024
          %1320 = vsyncadd %s1310, %s1319
          %s1321 = smul.addr %s1317, 128
          %s1322 = scalar_lea.hbm %s8, %s1321
          %s1324 = sshll.u32 %s1313, 4
          %s1325 = int_to_ptr.vmem [resolvable:$true] %s1324
          %1327 = dma.vmem_to_hbm [thread:$0]  %s1325, 1024, %s1322, %s1310
        $region76: #{tpu_custom_call.1} parent=51 // pred_fallthru
          _
      $region52: #{tpu_custom_call.1} parent=5 // pred_fallthru
        _
      %p1328 = scmp.le.s32.totalorder 2, %s23
      // Predicated region
      $region77: #{tpu_custom_call.1} parent=5 // pred_check
        %p1329 = pneg %p1328
      $region78: #{tpu_custom_call.1} parent=5 // pred_check_branch
        %1331 = sbr.rel (%p1329) target = $region80
      $region79: #{tpu_custom_call.1} parent=5 // pred_region
        %s1332 = ssub.s32 %s23, 2
        // Predicated region
        $region81: #{tpu_custom_call.1} parent=79 // pred_check
          %p1333 = pneg %p225
        $region82: #{tpu_custom_call.1} parent=79 // pred_check_branch
          %1335 = sbr.rel (%p1333) target = $region84
        $region83: #{tpu_custom_call.1} parent=79 // pred_region
          %s1336 = sand.u32 %s210, 1
          %s1337 = scalar_lea.sflag [#allocation4], %s1336
          %s1338 = sand.u32 %s210, 1
          %s1339 = smul.addr %s1338, 64
          %s1340 = scalar_lea.vmem [#allocation12], %s1339
          %1341 = dma.done %s1337, 1024
        $region84: #{tpu_custom_call.1} parent=79 // pred_fallthru
          _
      $region80: #{tpu_custom_call.1} parent=5 // pred_fallthru
        _
    $region6: #{tpu_custom_call.1} parent=1 // loop_footer
      %s27 = sadd.s32 1, %s23
    $region7: #{tpu_custom_call.1} parent=1 // loop_footer_branch
      %22 = sbr.rel target = $region3
    $region8: #{tpu_custom_call.1} parent=1 // loop_exit
      _
    %1342 = vsyncpa [#allocation3], 1
    %s1343 = scalar_lea.sflag [#allocation3], 1
    %1344 = vsyncpa %s1343, 1
    %1345 = vsyncpa [#allocation8], 1
    %1346 = vsyncpa [#allocation11], 1
    %1347 = vsyncpa [#allocation4], 1
    %s1348 = scalar_lea.sflag [#allocation4], 1
    %1349 = vsyncpa %s1348, 1
    %1350 = vsyncpa [#allocation5], 1
    %s1351 = scalar_lea.sflag [#allocation5], 1
    %1352 = vsyncpa %s1351, 1

</llo_original>
